<compile_context>
chip_gen: v7x
topology: tpu7x:2x2x1
jax: 0.10.0
libtpu: 0.0.40
codegen_flags: <defaults>
</compile_context>

<pallas_src>
import jax
import jax.numpy as jnp
from jax.experimental import pallas as pl
from jax.experimental.pallas import tpu as pltpu

H1_PAD = 512   # layer-1 width (400) padded up to a lane multiple
H2_PAD = 384   # layer-2 width (300) padded up to a lane multiple


def _round_up(x, m):
    return ((x + m - 1) // m) * m


def _cdiv(a, b):
    return -(-a // b)


def _default_block_batch_and_vmem():
    """Generation-aware defaults.

    v5e/v6e: 128 MiB physical VMEM -> 2048-row tiles, 64 MiB scoped cap.
    v7x:     64 MiB VMEM per TensorCore -> 1024-row tiles, 48 MiB cap
             (leaves >=16 MiB headroom)."""
    vmem_cap = 128 * 1024 * 1024
    try:
        vmem_cap = int(pltpu.get_tpu_info().vmem_capacity_bytes)
    except Exception:
        pass
    if vmem_cap <= 64 * 1024 * 1024:          # v7x-class
        return 1024, 48 * 1024 * 1024
    return 2048, 64 * 1024 * 1024             # v5e / v6e


def _choose_tiling(batch, max_tile):
    """Pick (tile_b, num_tiles): tile_b % 8 == 0, tile_b <= max(max_tile, 8),
    padding waste bounded, and an even tile count whenever there is more than
    one tile (so the v7x megacore splits the grid evenly across both cores)."""
    max_tile = max(8, (max_tile // 8) * 8)
    n = _cdiv(batch, max_tile)
    if n == 1 and batch >= 256:
        n = 2                                  # split big single tiles for megacore
    if n > 1 and n % 2:
        n += 1
    tile_b = min(max_tile, _round_up(_cdiv(batch, n), 8))
    n = _cdiv(batch, tile_b)
    if n > 1 and n % 2:
        n += 1                                 # worst case: one extra padded tile
    return tile_b, n


def _critic_kernel(x_ref, w14_ref, b14_ref, w2_ref, b2_ref, w5_ref, b5_ref,
                   w3r_ref, w6r_ref, out_ref):
    # Fused layer 1 of both towers, single dot, f32 throughout (K = in_dim is
    # tiny, so this matmul is result-stream bound; f32 costs nothing extra and
    # keeps the raw observations/actions unquantized).
    y = jnp.maximum(
        jnp.dot(x_ref[...], w14_ref[...], preferred_element_type=jnp.float32)
        + b14_ref[...],
        0.0)

    h = y[:, :H1_PAD].astype(jnp.bfloat16)   # 128-lane-aligned tower split
    g = y[:, H1_PAD:].astype(jnp.bfloat16)

    # Layer 2 of each tower: bf16 MXU matmuls with f32 accumulation.
    h2 = jnp.maximum(
        jnp.dot(h, w2_ref[...], preferred_element_type=jnp.float32) + b2_ref[...],
        0.0)
    g2 = jnp.maximum(
        jnp.dot(g, w5_ref[...], preferred_element_type=jnp.float32) + b5_ref[...],
        0.0)

    # Final (N=1) projections on the VPU + XLU lane reduce (no near-empty MXU
    # pipes).  The l3/l6 biases are folded into the padded "bias lane":
    # h2[:, -1] == 1.0 by construction and w3r[:, -1] == b3 (same for tower 2).
    # Direct column writes -> no concat relayout before the narrow store.
    out_ref[:, 0:1] = jnp.sum(h2 * w3r_ref[...], axis=-1, keepdims=True)
    out_ref[:, 1:2] = jnp.sum(g2 * w6r_ref[...], axis=-1, keepdims=True)


def init_critic_params(key, state_dim, action_dim):
    """PyTorch-style nn.Linear init (uniform +-1/sqrt(fan_in)).
    Weights stored as (in_features, out_features), biases as (1, out)."""
    dims = [
        ("1", state_dim + action_dim, 400),
        ("2", 400, 300),
        ("3", 300, 1),
        ("4", state_dim + action_dim, 400),
        ("5", 400, 300),
        ("6", 300, 1),
    ]
    params = {}
    for name, fan_in, fan_out in dims:
        key, kw, kb = jax.random.split(key, 3)
        bound = 1.0 / jnp.sqrt(fan_in)
        params[f"w{name}"] = jax.random.uniform(
            kw, (fan_in, fan_out), jnp.float32, -bound, bound)
        params[f"b{name}"] = jax.random.uniform(
            kb, (1, fan_out), jnp.float32, -bound, bound)
    return params


def prepare_params(params, state_dim, action_dim):
    """Fuse / pad / cast the PyTorch-style params into kernel-friendly form."""
    del state_dim, action_dim  # layer-1 weight is kept fused over [state, action]

    def pad_cols(w, n):
        return jnp.pad(w, ((0, 0), (0, n - w.shape[1])))

    def pad_rows(w, n):
        return jnp.pad(w, ((0, n - w.shape[0]), (0, 0)))

    # Fused layer 1 of both towers (kept in f32), padded to H1_PAD per tower.
    w14 = jnp.concatenate([pad_cols(params["w1"], H1_PAD),
                           pad_cols(params["w4"], H1_PAD)],
                          axis=1).astype(jnp.float32)          # (in_dim, 1024)
    b14 = jnp.concatenate([pad_cols(params["b1"], H1_PAD),
                           pad_cols(params["b4"], H1_PAD)],
                          axis=1).astype(jnp.float32)          # (1, 1024)

    def pad_hidden(w):
        return pad_cols(pad_rows(w, H1_PAD), H2_PAD)           # (512, 384)

    w2p = pad_hidden(params["w2"]).astype(jnp.bfloat16)
    w5p = pad_hidden(params["w5"]).astype(jnp.bfloat16)

    # Bias-lane fold: the last padded lane of layer 2 has an all-zero weight
    # column, so forcing its bias to 1.0 makes h2[:, -1] == relu(1) == 1 for
    # every row; putting b3/b6 into that lane of w3r/w6r adds the scalar bias
    # for free in the final lane reduce.
    bias_lane = H2_PAD - 1
    b2p = pad_cols(params["b2"], H2_PAD).at[0, bias_lane].set(1.0)
    b5p = pad_cols(params["b5"], H2_PAD).at[0, bias_lane].set(1.0)
    w3r = pad_cols(params["w3"].T, H2_PAD).at[0, bias_lane].set(params["b3"][0, 0])
    w6r = pad_cols(params["w6"].T, H2_PAD).at[0, bias_lane].set(params["b6"][0, 0])

    return dict(w14=w14, b14=b14,
                w2p=w2p, b2p=b2p.astype(jnp.float32),
                w5p=w5p, b5p=b5p.astype(jnp.float32),
                w3r=w3r.astype(jnp.float32), w6r=w6r.astype(jnp.float32))


def critic_forward(state, action, prepared, *, block_batch=None,
                   vmem_limit_bytes=None):
    """Pallas equivalent of Critic.forward -> (q1, q2), each (batch, 1)."""
    batch = state.shape[0]
    # Single concat in the wrapper -> one fused layer-1 dot in the kernel.
    x = jnp.concatenate([state.astype(jnp.float32),
                         action.astype(jnp.float32)], axis=1)
    in_dim = x.shape[1]

    if block_batch is None or vmem_limit_bytes is None:
        auto_block, auto_vmem = _default_block_batch_and_vmem()
        block_batch = auto_block if block_batch is None else block_batch
        vmem_limit_bytes = auto_vmem if vmem_limit_bytes is None else vmem_limit_bytes

    tile_b, num_tiles = _choose_tiling(batch, block_batch)
    padded = tile_b * num_tiles
    if padded != batch:
        x = jnp.pad(x, ((0, padded - batch), (0, 0)))

    param_order = ("w14", "b14", "w2p", "b2p", "w5p", "b5p", "w3r", "w6r")
    weight_args = tuple(prepared[k] for k in param_order)

    in_specs = (
        [pl.BlockSpec((tile_b, in_dim), lambda i: (i, 0))]
        # Weights/biases: full-array blocks, constant index map -> VMEM resident.
        + [pl.BlockSpec(w.shape, lambda i: (0, 0)) for w in weight_args]
    )
    out_spec = pl.BlockSpec((tile_b, 2), lambda i: (i, 0))

    flops = 2 * padded * (in_dim * 2 * H1_PAD + 2 * H1_PAD * H2_PAD + 2 * H2_PAD)
    bytes_accessed = (sum(int(w.size) * w.dtype.itemsize for w in weight_args)
                      + int(x.size) * 4 + padded * 2 * 4)
    cost = pl.CostEstimate(flops=flops, transcendentals=0,
                           bytes_accessed=bytes_accessed)

    out = pl.pallas_call(
        _critic_kernel,
        grid=(num_tiles,),
        in_specs=in_specs,
        out_specs=out_spec,
        out_shape=jax.ShapeDtypeStruct((padded, 2), jnp.float32),
        compiler_params=pltpu.CompilerParams(
            dimension_semantics=("parallel",),     # megacore sharding on v7x
            vmem_limit_bytes=vmem_limit_bytes),
        cost_estimate=cost,
    )(x, *weight_args)

    return out[:batch, 0:1], out[:batch, 1:2]


def critic_forward_ref(state, action, params):
    """Pure-JAX f32 reference (matches the PyTorch module exactly)."""
    x = jnp.concatenate([state, action], axis=1)
    h = jax.nn.relu(x @ params["w1"] + params["b1"])
    h = jax.nn.relu(h @ params["w2"] + params["b2"])
    q1 = h @ params["w3"] + params["b3"]
    g = jax.nn.relu(x @ params["w4"] + params["b4"])
    g = jax.nn.relu(g @ params["w5"] + params["b5"])
    q2 = g @ params["w6"] + params["b6"]
    return q1, q2


if __name__ == "__main__":
    # Pendulum-v0 sizes: state_dim=3, action_dim=1.
    state_dim, action_dim, batch = 3, 1, 64

    key = jax.random.PRNGKey(0)
    key, ks, ka = jax.random.split(key, 3)
    state = jax.random.normal(ks, (batch, state_dim), jnp.float32)
    action = jax.random.normal(ka, (batch, action_dim), jnp.float32)

    params = init_critic_params(key, state_dim, action_dim)
    prepared = prepare_params(params, state_dim, action_dim)
    q1_ref, q2_ref = critic_forward_ref(state, action, params)

    # 1) Small tile so the grid actually has >1 (even) step.
    fwd = jax.jit(lambda s, a, p: critic_forward(s, a, p, block_batch=32))
    q1, q2 = fwd(state, action, prepared)
    jax.block_until_ready((q1, q2))
    assert q1.shape == (batch, 1) and q2.shape == (batch, 1)
    assert jnp.allclose(q1, q1_ref, atol=5e-2, rtol=5e-2)
    assert jnp.allclose(q2, q2_ref, atol=5e-2, rtol=5e-2)

    # 2) Auto (generation-aware) tiling path, with a non-multiple-of-8 batch to
    #    exercise the batch-padding logic.
    sub = 37
    fwd_auto = jax.jit(lambda s, a, p: critic_forward(s, a, p))
    q1b, q2b = fwd_auto(state[:sub], action[:sub], prepared)
    jax.block_until_ready((q1b, q2b))
    assert q1b.shape == (sub, 1) and q2b.shape == (sub, 1)
    assert jnp.allclose(q1b, q1_ref[:sub], atol=5e-2, rtol=5e-2)
    assert jnp.allclose(q2b, q2_ref[:sub], atol=5e-2, rtol=5e-2)

    print("KERNEL_OK")
</pallas_src>

<mosaic_0001>
module attributes {stable_mosaic.version = 11 : i64} {
  func.func @_critic_kernel(%arg0: i32, %arg1: memref<32x4xf32, #tpu.memory_space<vmem>>, %arg2: memref<4x1024xf32, #tpu.memory_space<vmem>>, %arg3: memref<1x1024xf32, #tpu.memory_space<vmem>>, %arg4: memref<512x384xbf16, #tpu.memory_space<vmem>>, %arg5: memref<1x384xf32, #tpu.memory_space<vmem>>, %arg6: memref<512x384xbf16, #tpu.memory_space<vmem>>, %arg7: memref<1x384xf32, #tpu.memory_space<vmem>>, %arg8: memref<1x384xf32, #tpu.memory_space<vmem>>, %arg9: memref<1x384xf32, #tpu.memory_space<vmem>>, %arg10: memref<32x2xf32, #tpu.memory_space<vmem>>) attributes {dimension_semantics = [#tpu.dimension_semantics<parallel>], iteration_bounds = array<i64: 2>, scalar_prefetch = 0 : i64, scratch_operands = 0 : i64, tpu.core_type = #tpu.core_type<tc>, window_params = [{transform_indices = @transform_0, window_bounds = array<i64: 32, 4>}, {pipeline_mode = #tpu.pipeline_mode<synchronous>, transform_indices = @transform_1, window_bounds = array<i64: 4, 1024>}, {pipeline_mode = #tpu.pipeline_mode<synchronous>, transform_indices = @transform_2, window_bounds = array<i64: 1, 1024>}, {pipeline_mode = #tpu.pipeline_mode<synchronous>, transform_indices = @transform_3, window_bounds = array<i64: 512, 384>}, {pipeline_mode = #tpu.pipeline_mode<synchronous>, transform_indices = @transform_4, window_bounds = array<i64: 1, 384>}, {pipeline_mode = #tpu.pipeline_mode<synchronous>, transform_indices = @transform_5, window_bounds = array<i64: 512, 384>}, {pipeline_mode = #tpu.pipeline_mode<synchronous>, transform_indices = @transform_6, window_bounds = array<i64: 1, 384>}, {pipeline_mode = #tpu.pipeline_mode<synchronous>, transform_indices = @transform_7, window_bounds = array<i64: 1, 384>}, {pipeline_mode = #tpu.pipeline_mode<synchronous>, transform_indices = @transform_8, window_bounds = array<i64: 1, 384>}, {transform_indices = @transform_9, window_bounds = array<i64: 32, 2>}]} {
    %c0 = arith.constant 0 : index
    %c0_0 = arith.constant 0 : index
    %0 = vector.load %arg1[%c0, %c0_0] : memref<32x4xf32, #tpu.memory_space<vmem>>, vector<32x4xf32>
    %c0_1 = arith.constant 0 : index
    %c0_2 = arith.constant 0 : index
    %1 = vector.load %arg2[%c0_1, %c0_2] : memref<4x1024xf32, #tpu.memory_space<vmem>>, vector<4x1024xf32>
    %cst = arith.constant dense<0.000000e+00> : vector<32x1024xf32>
    %2 = tpu.matmul %0, %1, %cst {dimension_numbers = #tpu.dot_dimension_numbers<[1], [0], [0], [1], [0, 0, 1, 1], [], []>} : vector<32x4xf32>, vector<4x1024xf32>, vector<32x1024xf32> -> vector<32x1024xf32>
    %c0_3 = arith.constant 0 : index
    %c0_4 = arith.constant 0 : index
    %3 = vector.load %arg3[%c0_3, %c0_4] : memref<1x1024xf32, #tpu.memory_space<vmem>>, vector<1x1024xf32>
    %4 = vector.broadcast %3 : vector<1x1024xf32> to vector<32x1024xf32>
    %5 = arith.addf %2, %4 : vector<32x1024xf32>
    %cst_5 = arith.constant 0.000000e+00 : f32
    %6 = vector.broadcast %cst_5 : f32 to vector<32x1024xf32>
    %7 = arith.maximumf %5, %6 : vector<32x1024xf32>
    %8 = vector.extract_strided_slice %7 {offsets = [0, 0], sizes = [32, 512], strides = [1, 1]} : vector<32x1024xf32> to vector<32x512xf32>
    %9 = arith.truncf %8 : vector<32x512xf32> to vector<32x512xbf16>
    %10 = vector.extract_strided_slice %7 {offsets = [0, 512], sizes = [32, 512], strides = [1, 1]} : vector<32x1024xf32> to vector<32x512xf32>
    %11 = arith.truncf %10 : vector<32x512xf32> to vector<32x512xbf16>
    %c0_6 = arith.constant 0 : index
    %c0_7 = arith.constant 0 : index
    %12 = vector.load %arg4[%c0_6, %c0_7] : memref<512x384xbf16, #tpu.memory_space<vmem>>, vector<512x384xbf16>
    %cst_8 = arith.constant dense<0.000000e+00> : vector<32x384xf32>
    %13 = tpu.matmul %9, %12, %cst_8 {dimension_numbers = #tpu.dot_dimension_numbers<[1], [0], [0], [1], [0, 0, 1, 1], [], []>} : vector<32x512xbf16>, vector<512x384xbf16>, vector<32x384xf32> -> vector<32x384xf32>
    %c0_9 = arith.constant 0 : index
    %c0_10 = arith.constant 0 : index
    %14 = vector.load %arg5[%c0_9, %c0_10] : memref<1x384xf32, #tpu.memory_space<vmem>>, vector<1x384xf32>
    %15 = vector.broadcast %14 : vector<1x384xf32> to vector<32x384xf32>
    %16 = arith.addf %13, %15 : vector<32x384xf32>
    %cst_11 = arith.constant 0.000000e+00 : f32
    %17 = vector.broadcast %cst_11 : f32 to vector<32x384xf32>
    %18 = arith.maximumf %16, %17 : vector<32x384xf32>
    %c0_12 = arith.constant 0 : index
    %c0_13 = arith.constant 0 : index
    %19 = vector.load %arg6[%c0_12, %c0_13] : memref<512x384xbf16, #tpu.memory_space<vmem>>, vector<512x384xbf16>
    %cst_14 = arith.constant dense<0.000000e+00> : vector<32x384xf32>
    %20 = tpu.matmul %11, %19, %cst_14 {dimension_numbers = #tpu.dot_dimension_numbers<[1], [0], [0], [1], [0, 0, 1, 1], [], []>} : vector<32x512xbf16>, vector<512x384xbf16>, vector<32x384xf32> -> vector<32x384xf32>
    %c0_15 = arith.constant 0 : index
    %c0_16 = arith.constant 0 : index
    %21 = vector.load %arg7[%c0_15, %c0_16] : memref<1x384xf32, #tpu.memory_space<vmem>>, vector<1x384xf32>
    %22 = vector.broadcast %21 : vector<1x384xf32> to vector<32x384xf32>
    %23 = arith.addf %20, %22 : vector<32x384xf32>
    %cst_17 = arith.constant 0.000000e+00 : f32
    %24 = vector.broadcast %cst_17 : f32 to vector<32x384xf32>
    %25 = arith.maximumf %23, %24 : vector<32x384xf32>
    %c0_18 = arith.constant 0 : index
    %c0_19 = arith.constant 0 : index
    %26 = vector.load %arg8[%c0_18, %c0_19] : memref<1x384xf32, #tpu.memory_space<vmem>>, vector<1x384xf32>
    %27 = vector.broadcast %26 : vector<1x384xf32> to vector<32x384xf32>
    %28 = arith.mulf %18, %27 : vector<32x384xf32>
    %cst_20 = arith.constant dense<0.000000e+00> : vector<32xf32>
    %29 = vector.multi_reduction <add>, %28, %cst_20 [1] : vector<32x384xf32> to vector<32xf32>
    %30 = vector.shape_cast %29 : vector<32xf32> to vector<32x1xf32>
    %c0_21 = arith.constant 0 : index
    %c0_22 = arith.constant 0 : index
    %31 = vector.load %arg10[%c0_21, %c0_22] : memref<32x2xf32, #tpu.memory_space<vmem>>, vector<32x1xf32>
    tpu.vector_store %arg10[%c0_21, %c0_22], %30 {strides = array<i32>} : memref<32x2xf32, #tpu.memory_space<vmem>>, vector<32x1xf32>,
    %c0_23 = arith.constant 0 : index
    %c0_24 = arith.constant 0 : index
    %32 = vector.load %arg9[%c0_23, %c0_24] : memref<1x384xf32, #tpu.memory_space<vmem>>, vector<1x384xf32>
    %33 = vector.broadcast %32 : vector<1x384xf32> to vector<32x384xf32>
    %34 = arith.mulf %25, %33 : vector<32x384xf32>
    %cst_25 = arith.constant dense<0.000000e+00> : vector<32xf32>
    %35 = vector.multi_reduction <add>, %34, %cst_25 [1] : vector<32x384xf32> to vector<32xf32>
    %36 = vector.shape_cast %35 : vector<32xf32> to vector<32x1xf32>
    %c0_26 = arith.constant 0 : index
    %c1 = arith.constant 1 : index
    %37 = vector.load %arg10[%c0_26, %c1] : memref<32x2xf32, #tpu.memory_space<vmem>>, vector<32x1xf32>
    tpu.vector_store %arg10[%c0_26, %c1], %36 {strides = array<i32>} : memref<32x2xf32, #tpu.memory_space<vmem>>, vector<32x1xf32>,
    return
  }
  func.func @transform_0(%arg0: i32) -> (i32, i32) {
    %c0_i32 = arith.constant 0 : i32
    %c0_i32_0 = arith.constant 0 : i32
    return %arg0, %c0_i32 : i32, i32
  }
  func.func @transform_1(%arg0: i32) -> (i32, i32) {
    %c0_i32 = arith.constant 0 : i32
    %c0_i32_0 = arith.constant 0 : i32
    %c0_i32_1 = arith.constant 0 : i32
    return %c0_i32, %c0_i32_0 : i32, i32
  }
  func.func @transform_2(%arg0: i32) -> (i32, i32) {
    %c0_i32 = arith.constant 0 : i32
    %c0_i32_0 = arith.constant 0 : i32
    %c0_i32_1 = arith.constant 0 : i32
    return %c0_i32, %c0_i32_0 : i32, i32
  }
  func.func @transform_3(%arg0: i32) -> (i32, i32) {
    %c0_i32 = arith.constant 0 : i32
    %c0_i32_0 = arith.constant 0 : i32
    %c0_i32_1 = arith.constant 0 : i32
    return %c0_i32, %c0_i32_0 : i32, i32
  }
  func.func @transform_4(%arg0: i32) -> (i32, i32) {
    %c0_i32 = arith.constant 0 : i32
    %c0_i32_0 = arith.constant 0 : i32
    %c0_i32_1 = arith.constant 0 : i32
    return %c0_i32, %c0_i32_0 : i32, i32
  }
  func.func @transform_5(%arg0: i32) -> (i32, i32) {
    %c0_i32 = arith.constant 0 : i32
    %c0_i32_0 = arith.constant 0 : i32
    %c0_i32_1 = arith.constant 0 : i32
    return %c0_i32, %c0_i32_0 : i32, i32
  }
  func.func @transform_6(%arg0: i32) -> (i32, i32) {
    %c0_i32 = arith.constant 0 : i32
    %c0_i32_0 = arith.constant 0 : i32
    %c0_i32_1 = arith.constant 0 : i32
    return %c0_i32, %c0_i32_0 : i32, i32
  }
  func.func @transform_7(%arg0: i32) -> (i32, i32) {
    %c0_i32 = arith.constant 0 : i32
    %c0_i32_0 = arith.constant 0 : i32
    %c0_i32_1 = arith.constant 0 : i32
    return %c0_i32, %c0_i32_0 : i32, i32
  }
  func.func @transform_8(%arg0: i32) -> (i32, i32) {
    %c0_i32 = arith.constant 0 : i32
    %c0_i32_0 = arith.constant 0 : i32
    %c0_i32_1 = arith.constant 0 : i32
    return %c0_i32, %c0_i32_0 : i32, i32
  }
  func.func @transform_9(%arg0: i32) -> (i32, i32) {
    %c0_i32 = arith.constant 0 : i32
    %c0_i32_0 = arith.constant 0 : i32
    return %arg0, %c0_i32 : i32, i32
  }
}

</mosaic_0001>

<llo_original>
// kernel: _lambda_.1
$region0: #{_lambda_.1}
  #allocation0 [shape = 'u32[]', space=smem, size = 0x4, offset = 0x4, fixed_abs, tag = 'smem constant byte address 0x4 - core index']
  #allocation1 [shape = 'u32[144,128]{1,0:T(1,128)}', space=vmem, size = 0x12000, scoped, tag = 'internal scratch']
  %s0 = inlined_call_operand.hbm [shape: f32[64,4], index: 0, kind: input, shape index: {}]
  %s1 = inlined_call_operand.hbm [shape: f32[4,1024], index: 1, kind: input, shape index: {}]
  %s2 = inlined_call_operand.hbm [shape: f32[1,1024], index: 2, kind: input, shape index: {}]
  %s3 = inlined_call_operand.hbm [shape: bf16[512,384], index: 3, kind: input, shape index: {}]
  %s4 = inlined_call_operand.hbm [shape: f32[1,384], index: 4, kind: input, shape index: {}]
  %s5 = inlined_call_operand.hbm [shape: bf16[512,384], index: 5, kind: input, shape index: {}]
  %s6 = inlined_call_operand.hbm [shape: f32[1,384], index: 6, kind: input, shape index: {}]
  %s7 = inlined_call_operand.hbm [shape: f32[1,384], index: 7, kind: input, shape index: {}]
  %s8 = inlined_call_operand.hbm [shape: f32[1,384], index: 8, kind: input, shape index: {}]
  %s9 = inlined_call_operand.hbm [shape: f32[64,2], index: 9, kind: output, shape index: {}]
  %s10 = sld [smem:[#allocation0]]
  $region105: #{_lambda_.1} parent=0
    _
  %s12 = ssub.s32 1, %s10
  %s13 = scalar_select 0, %s12, %s10
  $region1: #{_lambda_.1} parent=0
    #allocation2 [shape = 'u8[32768]{0}', space=vmem, size = 0x8000, scoped, tag = 'input window, operand 0']
    #allocation3 [shape = 's32[2]{0}', space=sflag, size = 0x8, scoped, tag = 'scoped memory for _lambda_.1']
    #allocation4 [shape = 's32[2]{0}', space=sflag, size = 0x8, scoped, tag = 'scoped memory for _lambda_.1']
    #allocation5 [shape = 'u8[16384]{0}', space=vmem, size = 0x4000, scoped, tag = 'input window, operand 1, single buffered']
    #allocation6 [shape = 's32[1]{0}', space=sflag, size = 0x4, scoped, tag = 'scoped memory for _lambda_.1']
    #allocation7 [shape = 'u8[4096]{0}', space=vmem, size = 0x1000, scoped, tag = 'input window, operand 2, single buffered']
    #allocation8 [shape = 'u8[393216]{0}', space=vmem, size = 0x60000, scoped, tag = 'input window, operand 3, single buffered']
    #allocation9 [shape = 's32[1]{0}', space=sflag, size = 0x4, scoped, tag = 'scoped memory for _lambda_.1']
    #allocation10 [shape = 'u8[1536]{0}', space=vmem, size = 0x800, scoped, tag = 'input window, operand 4, single buffered']
    #allocation11 [shape = 'u8[393216]{0}', space=vmem, size = 0x60000, scoped, tag = 'input window, operand 5, single buffered']
    #allocation12 [shape = 's32[1]{0}', space=sflag, size = 0x4, scoped, tag = 'scoped memory for _lambda_.1']
    #allocation13 [shape = 'u8[1536]{0}', space=vmem, size = 0x800, scoped, tag = 'input window, operand 6, single buffered']
    #allocation14 [shape = 'u8[1536]{0}', space=vmem, size = 0x800, scoped, tag = 'input window, operand 7, single buffered']
    #allocation15 [shape = 's32[1]{0}', space=sflag, size = 0x4, scoped, tag = 'scoped memory for _lambda_.1']
    #allocation16 [shape = 'u8[1536]{0}', space=vmem, size = 0x800, scoped, tag = 'input window, operand 8, single buffered']
    #allocation17 [shape = 'u8[32768]{0}', space=vmem, size = 0x8000, scoped, tag = 'output window, operand 0']
    %14 = vsyncpa [#allocation3], 0
    %s15 = scalar_lea.sflag [#allocation3], 1
    %16 = vsyncpa %s15, 0
    %17 = vsyncpa [#allocation6], 0
    %18 = vsyncpa [#allocation9], 0
    %19 = vsyncpa [#allocation12], 0
    %20 = vsyncpa [#allocation15], 0
    %21 = vsyncpa [#allocation4], 0
    %s22 = scalar_lea.sflag [#allocation4], 1
    %23 = vsyncpa %s22, 0
    loop: start=0, step=1, limit=4
    $region2: #{_lambda_.1} parent=1 // loop_pre_header
      _
    $region3: #{_lambda_.1} parent=1 // loop_header
      %s25 = sphi 0, %s29
      %p26 = scmp.ge.s32.totalorder %s25, 4
      %s35 = sphi 0, %s37
      %s38 = sphi 0, %s35
      %s39 = sphi 0, %s38
      %s55 = sphi 0, %s39
      %s59 = sphi 0, %s59
      %s61 = sphi 0, %s59
      %s62 = sphi 0, %s61
      %s76 = sphi 0, %s62
      %s80 = sphi 0, %s80
      %s82 = sphi 0, %s80
      %s83 = sphi 0, %s82
      %s97 = sphi 0, %s83
      %s101 = sphi 0, %s101
      %s103 = sphi 0, %s101
      %s104 = sphi 0, %s103
      %s118 = sphi 0, %s104
      %s122 = sphi 0, %s122
      %s124 = sphi 0, %s122
      %s125 = sphi 0, %s124
      %s139 = sphi 0, %s125
      %s143 = sphi 0, %s143
      %s145 = sphi 0, %s143
      %s146 = sphi 0, %s145
      %s160 = sphi 0, %s146
      %s164 = sphi 0, %s164
      %s166 = sphi 0, %s164
      %s167 = sphi 0, %s166
      %s181 = sphi 0, %s167
      %s185 = sphi 0, %s185
      %s187 = sphi 0, %s185
      %s188 = sphi 0, %s187
      %s202 = sphi 0, %s188
      %s206 = sphi 0, %s206
      %s208 = sphi 0, %s206
      %s209 = sphi 0, %s208
      %s223 = sphi 0, %s209
      %s229 = sphi 0, %s231
      %s232 = sphi 0, %s229
      %s233 = sphi 0, %s232
      %s249 = sphi 0, %s233
    $region4: #{_lambda_.1} parent=1 // loop_header_branch
      %28 = sbr.rel (%p26) target = $region8
    $region5: #{_lambda_.1} parent=1 // loop_body
      %s30 = ssub.s32 %s25, 1
      %s31 = ssub.s32 %s25, 2
      %s32 = sadd.s32 %s25, 1
      %s33 = ssub.s32 %s25, %s32
      %p34 = scmp.eq.s32.totalorder %s33, 0
      %s36 = sadd.s32 %s35, 1
      %s37 = scalar_select %p34, %s35, %s36
      %p40 = pneg %p34
      %p41 = scmp.eq.s32.totalorder %s25, 1
      %p42 = por %p40, %p41
      %p43 = scmp.ne.s32.totalorder %s35, %s38
      %p44 = scmp.eq.s32.totalorder %s25, 0
      %p45 = por %p43, %p44
      %p46 = scmp.ne.s32.totalorder %s35, %s38
      %p47 = scmp.eq.s32.totalorder %s30, 1
      %p48 = por %p46, %p47
      %p49 = scmp.ne.s32.totalorder %s38, %s39
      %p50 = scmp.eq.s32.totalorder %s30, 0
      %p51 = por %p49, %p50
      %p52 = scmp.ne.s32.totalorder %s38, %s39
      %p53 = scmp.eq.s32.totalorder %s31, 1
      %p54 = por %p52, %p53
      %p56 = scmp.ne.s32.totalorder %s39, %s55
      %p57 = scmp.eq.s32.totalorder %s31, 0
      %p58 = por %p56, %p57
      %s60 = sadd.s32 %s59, 1
      %p63 = scmp.eq.s32.totalorder %s25, 1
      %p64 = scmp.ne.s32.totalorder %s59, %s61
      %p65 = scmp.eq.s32.totalorder %s25, 0
      %p66 = por %p64, %p65
      %p67 = scmp.ne.s32.totalorder %s59, %s61
      %p68 = scmp.eq.s32.totalorder %s30, 1
      %p69 = por %p67, %p68
      %p70 = scmp.ne.s32.totalorder %s61, %s62
      %p71 = scmp.eq.s32.totalorder %s30, 0
      %p72 = por %p70, %p71
      %p73 = scmp.ne.s32.totalorder %s61, %s62
      %p74 = scmp.eq.s32.totalorder %s31, 1
      %p75 = por %p73, %p74
      %p77 = scmp.ne.s32.totalorder %s62, %s76
      %p78 = scmp.eq.s32.totalorder %s31, 0
      %p79 = por %p77, %p78
      %s81 = sadd.s32 %s80, 1
      %p84 = scmp.eq.s32.totalorder %s25, 1
      %p85 = scmp.ne.s32.totalorder %s80, %s82
      %p86 = scmp.eq.s32.totalorder %s25, 0
      %p87 = por %p85, %p86
      %p88 = scmp.ne.s32.totalorder %s80, %s82
      %p89 = scmp.eq.s32.totalorder %s30, 1
      %p90 = por %p88, %p89
      %p91 = scmp.ne.s32.totalorder %s82, %s83
      %p92 = scmp.eq.s32.totalorder %s30, 0
      %p93 = por %p91, %p92
      %p94 = scmp.ne.s32.totalorder %s82, %s83
      %p95 = scmp.eq.s32.totalorder %s31, 1
      %p96 = por %p94, %p95
      %p98 = scmp.ne.s32.totalorder %s83, %s97
      %p99 = scmp.eq.s32.totalorder %s31, 0
      %p100 = por %p98, %p99
      %s102 = sadd.s32 %s101, 1
      %p105 = scmp.eq.s32.totalorder %s25, 1
      %p106 = scmp.ne.s32.totalorder %s101, %s103
      %p107 = scmp.eq.s32.totalorder %s25, 0
      %p108 = por %p106, %p107
      %p109 = scmp.ne.s32.totalorder %s101, %s103
      %p110 = scmp.eq.s32.totalorder %s30, 1
      %p111 = por %p109, %p110
      %p112 = scmp.ne.s32.totalorder %s103, %s104
      %p113 = scmp.eq.s32.totalorder %s30, 0
      %p114 = por %p112, %p113
      %p115 = scmp.ne.s32.totalorder %s103, %s104
      %p116 = scmp.eq.s32.totalorder %s31, 1
      %p117 = por %p115, %p116
      %p119 = scmp.ne.s32.totalorder %s104, %s118
      %p120 = scmp.eq.s32.totalorder %s31, 0
      %p121 = por %p119, %p120
      %s123 = sadd.s32 %s122, 1
      %p126 = scmp.eq.s32.totalorder %s25, 1
      %p127 = scmp.ne.s32.totalorder %s122, %s124
      %p128 = scmp.eq.s32.totalorder %s25, 0
      %p129 = por %p127, %p128
      %p130 = scmp.ne.s32.totalorder %s122, %s124
      %p131 = scmp.eq.s32.totalorder %s30, 1
      %p132 = por %p130, %p131
      %p133 = scmp.ne.s32.totalorder %s124, %s125
      %p134 = scmp.eq.s32.totalorder %s30, 0
      %p135 = por %p133, %p134
      %p136 = scmp.ne.s32.totalorder %s124, %s125
      %p137 = scmp.eq.s32.totalorder %s31, 1
      %p138 = por %p136, %p137
      %p140 = scmp.ne.s32.totalorder %s125, %s139
      %p141 = scmp.eq.s32.totalorder %s31, 0
      %p142 = por %p140, %p141
      %s144 = sadd.s32 %s143, 1
      %p147 = scmp.eq.s32.totalorder %s25, 1
      %p148 = scmp.ne.s32.totalorder %s143, %s145
      %p149 = scmp.eq.s32.totalorder %s25, 0
      %p150 = por %p148, %p149
      %p151 = scmp.ne.s32.totalorder %s143, %s145
      %p152 = scmp.eq.s32.totalorder %s30, 1
      %p153 = por %p151, %p152
      %p154 = scmp.ne.s32.totalorder %s145, %s146
      %p155 = scmp.eq.s32.totalorder %s30, 0
      %p156 = por %p154, %p155
      %p157 = scmp.ne.s32.totalorder %s145, %s146
      %p158 = scmp.eq.s32.totalorder %s31, 1
      %p159 = por %p157, %p158
      %p161 = scmp.ne.s32.totalorder %s146, %s160
      %p162 = scmp.eq.s32.totalorder %s31, 0
      %p163 = por %p161, %p162
      %s165 = sadd.s32 %s164, 1
      %p168 = scmp.eq.s32.totalorder %s25, 1
      %p169 = scmp.ne.s32.totalorder %s164, %s166
      %p170 = scmp.eq.s32.totalorder %s25, 0
      %p171 = por %p169, %p170
      %p172 = scmp.ne.s32.totalorder %s164, %s166
      %p173 = scmp.eq.s32.totalorder %s30, 1
      %p174 = por %p172, %p173
      %p175 = scmp.ne.s32.totalorder %s166, %s167
      %p176 = scmp.eq.s32.totalorder %s30, 0
      %p177 = por %p175, %p176
      %p178 = scmp.ne.s32.totalorder %s166, %s167
      %p179 = scmp.eq.s32.totalorder %s31, 1
      %p180 = por %p178, %p179
      %p182 = scmp.ne.s32.totalorder %s167, %s181
      %p183 = scmp.eq.s32.totalorder %s31, 0
      %p184 = por %p182, %p183
      %s186 = sadd.s32 %s185, 1
      %p189 = scmp.eq.s32.totalorder %s25, 1
      %p190 = scmp.ne.s32.totalorder %s185, %s187
      %p191 = scmp.eq.s32.totalorder %s25, 0
      %p192 = por %p190, %p191
      %p193 = scmp.ne.s32.totalorder %s185, %s187
      %p194 = scmp.eq.s32.totalorder %s30, 1
      %p195 = por %p193, %p194
      %p196 = scmp.ne.s32.totalorder %s187, %s188
      %p197 = scmp.eq.s32.totalorder %s30, 0
      %p198 = por %p196, %p197
      %p199 = scmp.ne.s32.totalorder %s187, %s188
      %p200 = scmp.eq.s32.totalorder %s31, 1
      %p201 = por %p199, %p200
      %p203 = scmp.ne.s32.totalorder %s188, %s202
      %p204 = scmp.eq.s32.totalorder %s31, 0
      %p205 = por %p203, %p204
      %s207 = sadd.s32 %s206, 1
      %p210 = scmp.eq.s32.totalorder %s25, 1
      %p211 = scmp.ne.s32.totalorder %s206, %s208
      %p212 = scmp.eq.s32.totalorder %s25, 0
      %p213 = por %p211, %p212
      %p214 = scmp.ne.s32.totalorder %s206, %s208
      %p215 = scmp.eq.s32.totalorder %s30, 1
      %p216 = por %p214, %p215
      %p217 = scmp.ne.s32.totalorder %s208, %s209
      %p218 = scmp.eq.s32.totalorder %s30, 0
      %p219 = por %p217, %p218
      %p220 = scmp.ne.s32.totalorder %s208, %s209
      %p221 = scmp.eq.s32.totalorder %s31, 1
      %p222 = por %p220, %p221
      %p224 = scmp.ne.s32.totalorder %s209, %s223
      %p225 = scmp.eq.s32.totalorder %s31, 0
      %p226 = por %p224, %p225
      %s227 = ssub.s32 %s25, %s32
      %p228 = scmp.eq.s32.totalorder %s227, 0
      %s230 = sadd.s32 %s229, 1
      %s231 = scalar_select %p228, %s229, %s230
      %p234 = pneg %p228
      %p235 = scmp.eq.s32.totalorder %s25, 1
      %p236 = por %p234, %p235
      %p237 = scmp.ne.s32.totalorder %s229, %s232
      %p238 = scmp.eq.s32.totalorder %s25, 0
      %p239 = por %p237, %p238
      %p240 = scmp.ne.s32.totalorder %s229, %s232
      %p241 = scmp.eq.s32.totalorder %s30, 1
      %p242 = por %p240, %p241
      %p243 = scmp.ne.s32.totalorder %s232, %s233
      %p244 = scmp.eq.s32.totalorder %s30, 0
      %p245 = por %p243, %p244
      %p246 = scmp.ne.s32.totalorder %s232, %s233
      %p247 = scmp.eq.s32.totalorder %s31, 1
      %p248 = por %p246, %p247
      %p250 = scmp.ne.s32.totalorder %s233, %s249
      %p251 = scmp.eq.s32.totalorder %s31, 0
      %p252 = por %p250, %p251
      %p253 = scmp.le.s32.totalorder 1, %s25
      %p254 = scmp.lt.s32.totalorder %s25, 3
      %p255 = pnand %p253, %p254
      %p256 = pneg %p255
      // Predicated region
      $region9: #{_lambda_.1} parent=5 // pred_check
        _
      $region10: #{_lambda_.1} parent=5 // pred_check_branch
        %258 = sbr.rel (%p255) target = $region12
      $region11: #{_lambda_.1} parent=5 // pred_region
        %s259 = ssub.s32 %s25, 1
        // Predicated region
        $region13: #{_lambda_.1} parent=11 // pred_check
          %p260 = pneg %p72
        $region14: #{_lambda_.1} parent=11 // pred_check_branch
          %262 = sbr.rel (%p260) target = $region16
        $region15: #{_lambda_.1} parent=11 // pred_region
          %s264 = ssub.s32 512, 512
          %265 = vsyncadd [#allocation6], %s264
          %s267 = sshll.u32 [#allocation5], 4
          %s268 = int_to_ptr.vmem [resolvable:$true] %s267
          %270 = dma.hbm_to_vmem [thread:$0]  %s1, 512, %s268, [#allocation6]
        $region16: #{_lambda_.1} parent=11 // pred_fallthru
          _
        // Predicated region
        $region17: #{_lambda_.1} parent=11 // pred_check
          %p271 = pneg %p93
        $region18: #{_lambda_.1} parent=11 // pred_check_branch
          %273 = sbr.rel (%p271) target = $region20
        $region19: #{_lambda_.1} parent=11 // pred_region
          %s275 = ssub.s32 128, 128
          %276 = vsyncadd [#allocation6], %s275
          %s278 = sshll.u32 [#allocation7], 4
          %s279 = int_to_ptr.vmem [resolvable:$true] %s278
          %281 = dma.hbm_to_vmem [thread:$0]  %s2, 128, %s279, [#allocation6]
        $region20: #{_lambda_.1} parent=11 // pred_fallthru
          _
        // Predicated region
        $region21: #{_lambda_.1} parent=11 // pred_check
          %p282 = pneg %p114
        $region22: #{_lambda_.1} parent=11 // pred_check_branch
          %284 = sbr.rel (%p282) target = $region24
        $region23: #{_lambda_.1} parent=11 // pred_region
          %s286 = ssub.s32 12288, 12288
          %287 = vsyncadd [#allocation9], %s286
          %s288 = sshll.u32 [#allocation8], 4
          %s289 = int_to_ptr.vmem [resolvable:$true] %s288
          %294 = dma.hbm_to_vmem [thread:$0]  %s3, 12288, %s289, [#allocation9], 192, 192, 12
        $region24: #{_lambda_.1} parent=11 // pred_fallthru
          _
        // Predicated region
        $region25: #{_lambda_.1} parent=11 // pred_check
          %p295 = pneg %p135
        $region26: #{_lambda_.1} parent=11 // pred_check_branch
          %297 = sbr.rel (%p295) target = $region28
        $region27: #{_lambda_.1} parent=11 // pred_region
          %s299 = ssub.s32 48, 48
          %300 = vsyncadd [#allocation9], %s299
          %s302 = sshll.u32 [#allocation10], 4
          %s303 = int_to_ptr.vmem [resolvable:$true] %s302
          %305 = dma.hbm_to_vmem [thread:$0]  %s4, 48, %s303, [#allocation9]
        $region28: #{_lambda_.1} parent=11 // pred_fallthru
          _
        // Predicated region
        $region29: #{_lambda_.1} parent=11 // pred_check
          %p306 = pneg %p156
        $region30: #{_lambda_.1} parent=11 // pred_check_branch
          %308 = sbr.rel (%p306) target = $region32
        $region31: #{_lambda_.1} parent=11 // pred_region
          %s310 = ssub.s32 12288, 12288
          %311 = vsyncadd [#allocation12], %s310
          %s312 = sshll.u32 [#allocation11], 4
          %s313 = int_to_ptr.vmem [resolvable:$true] %s312
          %318 = dma.hbm_to_vmem [thread:$0]  %s5, 12288, %s313, [#allocation12], 192, 192, 12
        $region32: #{_lambda_.1} parent=11 // pred_fallthru
          _
        // Predicated region
        $region33: #{_lambda_.1} parent=11 // pred_check
          %p319 = pneg %p177
        $region34: #{_lambda_.1} parent=11 // pred_check_branch
          %321 = sbr.rel (%p319) target = $region36
        $region35: #{_lambda_.1} parent=11 // pred_region
          %s323 = ssub.s32 48, 48
          %324 = vsyncadd [#allocation12], %s323
          %s326 = sshll.u32 [#allocation13], 4
          %s327 = int_to_ptr.vmem [resolvable:$true] %s326
          %329 = dma.hbm_to_vmem [thread:$0]  %s6, 48, %s327, [#allocation12]
        $region36: #{_lambda_.1} parent=11 // pred_fallthru
          _
        // Predicated region
        $region37: #{_lambda_.1} parent=11 // pred_check
          %p330 = pneg %p198
        $region38: #{_lambda_.1} parent=11 // pred_check_branch
          %332 = sbr.rel (%p330) target = $region40
        $region39: #{_lambda_.1} parent=11 // pred_region
          %s334 = ssub.s32 48, 48
          %335 = vsyncadd [#allocation15], %s334
          %s337 = sshll.u32 [#allocation14], 4
          %s338 = int_to_ptr.vmem [resolvable:$true] %s337
          %340 = dma.hbm_to_vmem [thread:$0]  %s7, 48, %s338, [#allocation15]
        $region40: #{_lambda_.1} parent=11 // pred_fallthru
          _
        // Predicated region
        $region41: #{_lambda_.1} parent=11 // pred_check
          %p341 = pneg %p219
        $region42: #{_lambda_.1} parent=11 // pred_check_branch
          %343 = sbr.rel (%p341) target = $region44
        $region43: #{_lambda_.1} parent=11 // pred_region
          %s345 = ssub.s32 48, 48
          %346 = vsyncadd [#allocation15], %s345
          %s348 = sshll.u32 [#allocation16], 4
          %s349 = int_to_ptr.vmem [resolvable:$true] %s348
          %351 = dma.hbm_to_vmem [thread:$0]  %s8, 48, %s349, [#allocation15]
        $region44: #{_lambda_.1} parent=11 // pred_fallthru
          _
      $region12: #{_lambda_.1} parent=5 // pred_fallthru
        _
      %p352 = scmp.lt.s32.totalorder %s25, 2
      // Predicated region
      $region45: #{_lambda_.1} parent=5 // pred_check
        %p353 = pneg %p352
      $region46: #{_lambda_.1} parent=5 // pred_check_branch
        %355 = sbr.rel (%p353) target = $region48
      $region47: #{_lambda_.1} parent=5 // pred_region
        // Predicated region
        $region49: #{_lambda_.1} parent=47 // pred_check
          %p356 = pneg %p45
        $region50: #{_lambda_.1} parent=47 // pred_check_branch
          %358 = sbr.rel (%p356) target = $region52
        $region51: #{_lambda_.1} parent=47 // pred_region
          %s359 = sand.u32 %s35, 1
          %s360 = scalar_lea.sflag [#allocation3], %s359
          %s361 = sand.u32 %s35, 1
          %s362 = smul.addr %s361, 32
          %s363 = scalar_lea.vmem [#allocation2], %s362
          %s364 = smul.u32 4, %s25
          %s366 = ssub.s32 512, 512
          %367 = vsyncadd %s360, %s366
          %s368 = smul.addr %s364, 128
          %s369 = scalar_lea.hbm %s0, %s368
          %s370 = sshll.u32 %s363, 4
          %s371 = int_to_ptr.vmem [resolvable:$true] %s370
          %376 = dma.hbm_to_vmem [thread:$0]  %s369, 512, %s371, %s360, 128, 128, 8
        $region52: #{_lambda_.1} parent=47 // pred_fallthru
          _
      $region48: #{_lambda_.1} parent=5 // pred_fallthru
        _
      %p377 = scmp.le.s32.totalorder 1, %s25
      %p378 = scmp.lt.s32.totalorder %s25, 3
      %p379 = pnand %p377, %p378
      %p380 = pneg %p379
      // Predicated region
      $region53: #{_lambda_.1} parent=5 // pred_check
        _
      $region54: #{_lambda_.1} parent=5 // pred_check_branch
        %382 = sbr.rel (%p379) target = $region56
      $region55: #{_lambda_.1} parent=5 // pred_region
        %s383 = ssub.s32 %s25, 1
        %s384 = sand.u32 %s38, 1
        %s385 = scalar_lea.sflag [#allocation3], %s384
        %s386 = sand.u32 %s38, 1
        %s387 = smul.addr %s386, 32
        %s388 = scalar_lea.vmem [#allocation2], %s387
        // Predicated region
        $region57: #{_lambda_.1} parent=55 // pred_check
          %p389 = pneg %p51
        $region58: #{_lambda_.1} parent=55 // pred_check_branch
          %391 = sbr.rel (%p389) target = $region60
        $region59: #{_lambda_.1} parent=55 // pred_region
          %392 = dma.done %s385, 512
        $region60: #{_lambda_.1} parent=55 // pred_fallthru
          _
        // Predicated region
        $region61: #{_lambda_.1} parent=55 // pred_check
          %p393 = pneg %p72
        $region62: #{_lambda_.1} parent=55 // pred_check_branch
          %395 = sbr.rel (%p393) target = $region64
        $region63: #{_lambda_.1} parent=55 // pred_region
          %396 = dma.done [#allocation6], 512
        $region64: #{_lambda_.1} parent=55 // pred_fallthru
          _
        // Predicated region
        $region65: #{_lambda_.1} parent=55 // pred_check
          %p397 = pneg %p93
        $region66: #{_lambda_.1} parent=55 // pred_check_branch
          %399 = sbr.rel (%p397) target = $region68
        $region67: #{_lambda_.1} parent=55 // pred_region
          %400 = dma.done [#allocation6], 128
        $region68: #{_lambda_.1} parent=55 // pred_fallthru
          _
        // Predicated region
        $region69: #{_lambda_.1} parent=55 // pred_check
          %p401 = pneg %p114
        $region70: #{_lambda_.1} parent=55 // pred_check_branch
          %403 = sbr.rel (%p401) target = $region72
        $region71: #{_lambda_.1} parent=55 // pred_region
          %404 = dma.done [#allocation9], 12288
        $region72: #{_lambda_.1} parent=55 // pred_fallthru
          _
        // Predicated region
        $region73: #{_lambda_.1} parent=55 // pred_check
          %p405 = pneg %p135
        $region74: #{_lambda_.1} parent=55 // pred_check_branch
          %407 = sbr.rel (%p405) target = $region76
        $region75: #{_lambda_.1} parent=55 // pred_region
          %408 = dma.done [#allocation9], 48
        $region76: #{_lambda_.1} parent=55 // pred_fallthru
          _
        // Predicated region
        $region77: #{_lambda_.1} parent=55 // pred_check
          %p409 = pneg %p156
        $region78: #{_lambda_.1} parent=55 // pred_check_branch
          %411 = sbr.rel (%p409) target = $region80
        $region79: #{_lambda_.1} parent=55 // pred_region
          %412 = dma.done [#allocation12], 12288
        $region80: #{_lambda_.1} parent=55 // pred_fallthru
          _
        // Predicated region
        $region81: #{_lambda_.1} parent=55 // pred_check
          %p413 = pneg %p177
        $region82: #{_lambda_.1} parent=55 // pred_check_branch
          %415 = sbr.rel (%p413) target = $region84
        $region83: #{_lambda_.1} parent=55 // pred_region
          %416 = dma.done [#allocation12], 48
        $region84: #{_lambda_.1} parent=55 // pred_fallthru
          _
        // Predicated region
        $region85: #{_lambda_.1} parent=55 // pred_check
          %p417 = pneg %p198
        $region86: #{_lambda_.1} parent=55 // pred_check_branch
          %419 = sbr.rel (%p417) target = $region88
        $region87: #{_lambda_.1} parent=55 // pred_region
          %420 = dma.done [#allocation15], 48
        $region88: #{_lambda_.1} parent=55 // pred_fallthru
          _
        // Predicated region
        $region89: #{_lambda_.1} parent=55 // pred_check
          %p421 = pneg %p219
        $region90: #{_lambda_.1} parent=55 // pred_check_branch
          %423 = sbr.rel (%p421) target = $region92
        $region91: #{_lambda_.1} parent=55 // pred_region
          %424 = dma.done [#allocation15], 48
        $region92: #{_lambda_.1} parent=55 // pred_fallthru
          _
        %s425 = sand.u32 %s38, 1
        %s426 = scalar_lea.sflag [#allocation3], %s425
        %s427 = sand.u32 %s38, 1
        %s428 = smul.addr %s427, 32
        %s429 = scalar_lea.vmem [#allocation2], %s428
        %p430 = pneg %p51
        %p431 = pneg %p48
        %p432 = pneg %p72
        %p433 = pneg %p69
        %p434 = pneg %p93
        %p435 = pneg %p90
        %p436 = pneg %p114
        %p437 = pneg %p111
        %p438 = pneg %p135
        %p439 = pneg %p132
        %p440 = pneg %p156
        %p441 = pneg %p153
        %p442 = pneg %p177
        %p443 = pneg %p174
        %p444 = pneg %p198
        %p445 = pneg %p195
        %p446 = pneg %p219
        %p447 = pneg %p216
        %p448 = pneg %p245
        %p449 = pneg %p242
        %s450 = sand.u32 %s232, 1
        %s451 = scalar_lea.sflag [#allocation4], %s450
        %s452 = sand.u32 %s232, 1
        %s453 = smul.addr %s452, 32
        %s454 = scalar_lea.vmem [#allocation17], %s453
        %s455 = smul.u32 4, %s30
        %s456 = smul.u32 4, %s30
        %v458 = vld [vmem:[%s388] sm:$0xff]
        %v459 = vld [vmem:[%s388 + $0x8] sm:$0xff]
        %v460 = vld [vmem:[%s388 + $0x10] sm:$0xff]
        %v461 = vld [vmem:[%s388 + $0x18] sm:$0xff]
        %v462 = vld [vmem:[#allocation5] sm:$0xff]
        %v463 = vld [vmem:[#allocation5 + $0x8] sm:$0xff]
        %v464 = vld [vmem:[#allocation5 + $0x10] sm:$0xff]
        %v465 = vld [vmem:[#allocation5 + $0x18] sm:$0xff]
        %v466 = vld [vmem:[#allocation7] sm:$0xff]
        %v468 = vlaneseq
        %v469 = vshrl.u32 %v468, 7
        %v470 = vsub.s32 0, %v469
        %v471 = vrot.slane %v466, %v470
        %v472 = vlaneseq
        %v473 = vshrl.u32 %v472, 7
        %v474 = vsub.s32 1, %v473
        %v475 = vrot.slane %v466, %v474
        %v476 = vlaneseq
        %v477 = vshrl.u32 %v476, 7
        %v478 = vsub.s32 2, %v477
        %v479 = vrot.slane %v466, %v478
        %v480 = vlaneseq
        %v481 = vshrl.u32 %v480, 7
        %v482 = vsub.s32 3, %v481
        %v483 = vrot.slane %v466, %v482
        %v484 = vlaneseq
        %v485 = vshrl.u32 %v484, 7
        %v486 = vsub.s32 4, %v485
        %v487 = vrot.slane %v466, %v486
        %v488 = vlaneseq
        %v489 = vshrl.u32 %v488, 7
        %v490 = vsub.s32 5, %v489
        %v491 = vrot.slane %v466, %v490
        %v492 = vlaneseq
        %v493 = vshrl.u32 %v492, 7
        %v494 = vsub.s32 6, %v493
        %v495 = vrot.slane %v466, %v494
        %v496 = vlaneseq
        %v497 = vshrl.u32 %v496, 7
        %v498 = vsub.s32 7, %v497
        %v499 = vrot.slane %v466, %v498
        %v512 = vcombine.high %v462, %v462
        %v513 = vcombine.high %v463, %v463
        %v514 = vcombine.high %v464, %v464
        %v515 = vcombine.high %v465, %v465
        %vm516 = vcmask 31744
        %v518 = vsel %vm516, %v458, 0
        %v521 = vsel %vm516, %v459, 0
        %v524 = vsel %vm516, %v460, 0
        %v527 = vsel %vm516, %v461, 0
        %vm529 = vcmask 1043456
        %v530 = vsel %vm529, %v462, 0
        %v532 = vsel %vm529, %v512, 0
        %v534 = vsel %vm529, %v463, 0
        %v536 = vsel %vm529, %v513, 0
        %v538 = vsel %vm529, %v464, 0
        %v540 = vsel %vm529, %v514, 0
        %v542 = vsel %vm529, %v465, 0
        %v544 = vsel %vm529, %v515, 0
        %546 = vmatprep.subr.mxu0 %v532
        %547 = vmatpush1.msra.mxu0 %v530
        %548 = vmatprep.subr.mxu0 0.0
        %549 = vmatpush1.msra.mxu0 0.0
        %550 = vmatprep.subr.mxu0 0.0
        %551 = vmatpush1.msra.mxu0 0.0
        %552 = vmatprep.subr.mxu0 0.0
        %553 = vmatpush1.msra.mxu0 0.0
        %554 = vmatprep.subr.mxu0 0.0
        %555 = vmatpush1.msra.mxu0 0.0
        %556 = vmatprep.subr.mxu0 0.0
        %557 = vmatpush1.msra.mxu0 0.0
        %558 = vmatprep.subr.mxu0 0.0
        %559 = vmatpush1.msra.mxu0 0.0
        %560 = vmatprep.subr.mxu0 0.0
        %561 = vmatpush1.msra.mxu0 0.0
        %562 = vmatprep.subr.mxu0 0.0
        %563 = vmatpush1.msra.mxu0 0.0
        %564 = vmatprep.subr.mxu0 0.0
        %565 = vmatpush1.msra.mxu0 0.0
        %566 = vmatprep.subr.mxu0 0.0
        %567 = vmatpush1.msra.mxu0 0.0
        %568 = vmatprep.subr.mxu0 0.0
        %569 = vmatpush1.msra.mxu0 0.0
        %570 = vmatprep.subr.mxu0 0.0
        %571 = vmatpush1.msra.mxu0 0.0
        %572 = vmatprep.subr.mxu0 0.0
        %573 = vmatpush1.msra.mxu0 0.0
        %574 = vmatprep.subr.mxu0 0.0
        %575 = vmatpush1.msra.mxu0 0.0
        %576 = vmatprep.subr.mxu0 0.0
        %577 = vmatpush1.msra.mxu0 0.0
        %578 = vmatprep.subr.mxu0 0.0
        %579 = vmatpush1.msra.mxu0 0.0
        %580 = vmatprep.subr.mxu0 0.0
        %581 = vmatpush1.msra.mxu0 0.0
        %582 = vmatprep.subr.mxu0 0.0
        %583 = vmatpush1.msra.mxu0 0.0
        %584 = vmatprep.subr.mxu0 0.0
        %585 = vmatpush1.msra.mxu0 0.0
        %586 = vmatprep.subr.mxu0 0.0
        %587 = vmatpush1.msra.mxu0 0.0
        %588 = vmatprep.subr.mxu0 0.0
        %589 = vmatpush1.msra.mxu0 0.0
        %590 = vmatprep.subr.mxu0 0.0
        %591 = vmatpush1.msra.mxu0 0.0
        %592 = vmatprep.subr.mxu0 0.0
        %593 = vmatpush1.msra.mxu0 0.0
        %594 = vmatprep.subr.mxu0 0.0
        %595 = vmatpush1.msra.mxu0 0.0
        %596 = vmatprep.subr.mxu0 0.0
        %597 = vmatpush1.msra.mxu0 0.0
        %598 = vmatprep.subr.mxu0 0.0
        %599 = vmatpush1.msra.mxu0 0.0
        %600 = vmatprep.subr.mxu0 0.0
        %601 = vmatpush1.msra.mxu0 0.0
        %602 = vmatprep.subr.mxu0 0.0
        %603 = vmatpush1.msra.mxu0 0.0
        %604 = vmatprep.subr.mxu0 0.0
        %605 = vmatpush1.msra.mxu0 0.0
        %606 = vmatprep.subr.mxu0 0.0
        %607 = vmatpush1.msra.mxu0 0.0
        %608 = vmatprep.subr.mxu0 0.0
        %609 = vmatpush1.msra.mxu0 0.0
        %610 = vmatprep.mubr.f32.mxu0 0.0
        %611 = vmatmul.mubr.f32.gmra.mrb[0].mxu0 %v518
        %v612 = vpop.f32.mrb[0].mxu0
        %v613 = vadd.f32 %v471, %v612
        %v614 = vpop.f32.mrb[0].mxu0
        %v615 = vadd.f32 %v475, %v614
        %616 = vmatprep.mubr.f32.mxu0 0.0
        %617 = vmatmul.mubr.f32.gmra.mrb[0].mxu0 %v521
        %v618 = vpop.f32.mrb[0].mxu0
        %v619 = vadd.f32 %v471, %v618
        %v620 = vpop.f32.mrb[0].mxu0
        %v621 = vadd.f32 %v475, %v620
        %622 = vmatprep.mubr.f32.mxu0 0.0
        %623 = vmatmul.mubr.f32.gmra.mrb[0].mxu0 %v524
        %v624 = vpop.f32.mrb[0].mxu0
        %v625 = vadd.f32 %v471, %v624
        %v626 = vpop.f32.mrb[0].mxu0
        %v627 = vadd.f32 %v475, %v626
        %628 = vmatprep.mubr.f32.mxu0 0.0
        %629 = vmatmul.mubr.f32.gmra.mrb[0].mxu0 %v527
        %v630 = vpop.f32.mrb[0].mxu0
        %v631 = vadd.f32 %v471, %v630
        %v632 = vpop.f32.mrb[0].mxu0
        %v633 = vadd.f32 %v475, %v632
        %634 = vdwg.mxu0
        %635 = vmatprep.subr.mxu0 %v536
        %636 = vmatpush1.msra.mxu0 %v534
        %637 = vmatprep.subr.mxu0 0.0
        %638 = vmatpush1.msra.mxu0 0.0
        %639 = vmatprep.subr.mxu0 0.0
        %640 = vmatpush1.msra.mxu0 0.0
        %641 = vmatprep.subr.mxu0 0.0
        %642 = vmatpush1.msra.mxu0 0.0
        %643 = vmatprep.subr.mxu0 0.0
        %644 = vmatpush1.msra.mxu0 0.0
        %645 = vmatprep.subr.mxu0 0.0
        %646 = vmatpush1.msra.mxu0 0.0
        %647 = vmatprep.subr.mxu0 0.0
        %648 = vmatpush1.msra.mxu0 0.0
        %649 = vmatprep.subr.mxu0 0.0
        %650 = vmatpush1.msra.mxu0 0.0
        %651 = vmatprep.subr.mxu0 0.0
        %652 = vmatpush1.msra.mxu0 0.0
        %653 = vmatprep.subr.mxu0 0.0
        %654 = vmatpush1.msra.mxu0 0.0
        %655 = vmatprep.subr.mxu0 0.0
        %656 = vmatpush1.msra.mxu0 0.0
        %657 = vmatprep.subr.mxu0 0.0
        %658 = vmatpush1.msra.mxu0 0.0
        %659 = vmatprep.subr.mxu0 0.0
        %660 = vmatpush1.msra.mxu0 0.0
        %661 = vmatprep.subr.mxu0 0.0
        %662 = vmatpush1.msra.mxu0 0.0
        %663 = vmatprep.subr.mxu0 0.0
        %664 = vmatpush1.msra.mxu0 0.0
        %665 = vmatprep.subr.mxu0 0.0
        %666 = vmatpush1.msra.mxu0 0.0
        %667 = vmatprep.subr.mxu0 0.0
        %668 = vmatpush1.msra.mxu0 0.0
        %669 = vmatprep.subr.mxu0 0.0
        %670 = vmatpush1.msra.mxu0 0.0
        %671 = vmatprep.subr.mxu0 0.0
        %672 = vmatpush1.msra.mxu0 0.0
        %673 = vmatprep.subr.mxu0 0.0
        %674 = vmatpush1.msra.mxu0 0.0
        %675 = vmatprep.subr.mxu0 0.0
        %676 = vmatpush1.msra.mxu0 0.0
        %677 = vmatprep.subr.mxu0 0.0
        %678 = vmatpush1.msra.mxu0 0.0
        %679 = vmatprep.subr.mxu0 0.0
        %680 = vmatpush1.msra.mxu0 0.0
        %681 = vmatprep.subr.mxu0 0.0
        %682 = vmatpush1.msra.mxu0 0.0
        %683 = vmatprep.subr.mxu0 0.0
        %684 = vmatpush1.msra.mxu0 0.0
        %685 = vmatprep.subr.mxu0 0.0
        %686 = vmatpush1.msra.mxu0 0.0
        %687 = vmatprep.subr.mxu0 0.0
        %688 = vmatpush1.msra.mxu0 0.0
        %689 = vmatprep.subr.mxu0 0.0
        %690 = vmatpush1.msra.mxu0 0.0
        %691 = vmatprep.subr.mxu0 0.0
        %692 = vmatpush1.msra.mxu0 0.0
        %693 = vmatprep.subr.mxu0 0.0
        %694 = vmatpush1.msra.mxu0 0.0
        %695 = vmatprep.subr.mxu0 0.0
        %696 = vmatpush1.msra.mxu0 0.0
        %697 = vmatprep.subr.mxu0 0.0
        %698 = vmatpush1.msra.mxu0 0.0
        %699 = vmatprep.mubr.f32.mxu0 0.0
        %700 = vmatmul.mubr.f32.gmra.mrb[0].mxu0 %v518
        %v701 = vpop.f32.mrb[0].mxu0
        %v702 = vadd.f32 %v479, %v701
        %v703 = vpop.f32.mrb[0].mxu0
        %v704 = vadd.f32 %v483, %v703
        %705 = vmatprep.mubr.f32.mxu0 0.0
        %706 = vmatmul.mubr.f32.gmra.mrb[0].mxu0 %v521
        %v707 = vpop.f32.mrb[0].mxu0
        %v708 = vadd.f32 %v479, %v707
        %v709 = vpop.f32.mrb[0].mxu0
        %v710 = vadd.f32 %v483, %v709
        %711 = vmatprep.mubr.f32.mxu0 0.0
        %712 = vmatmul.mubr.f32.gmra.mrb[0].mxu0 %v524
        %v713 = vpop.f32.mrb[0].mxu0
        %v714 = vadd.f32 %v479, %v713
        %v715 = vpop.f32.mrb[0].mxu0
        %v716 = vadd.f32 %v483, %v715
        %717 = vmatprep.mubr.f32.mxu0 0.0
        %718 = vmatmul.mubr.f32.gmra.mrb[0].mxu0 %v527
        %v719 = vpop.f32.mrb[0].mxu0
        %v720 = vadd.f32 %v479, %v719
        %v721 = vpop.f32.mrb[0].mxu0
        %v722 = vadd.f32 %v483, %v721
        %723 = vdwg.mxu0
        %724 = vmatprep.subr.mxu0 %v540
        %725 = vmatpush1.msra.mxu0 %v538
        %726 = vmatprep.subr.mxu0 0.0
        %727 = vmatpush1.msra.mxu0 0.0
        %728 = vmatprep.subr.mxu0 0.0
        %729 = vmatpush1.msra.mxu0 0.0
        %730 = vmatprep.subr.mxu0 0.0
        %731 = vmatpush1.msra.mxu0 0.0
        %732 = vmatprep.subr.mxu0 0.0
        %733 = vmatpush1.msra.mxu0 0.0
        %734 = vmatprep.subr.mxu0 0.0
        %735 = vmatpush1.msra.mxu0 0.0
        %736 = vmatprep.subr.mxu0 0.0
        %737 = vmatpush1.msra.mxu0 0.0
        %738 = vmatprep.subr.mxu0 0.0
        %739 = vmatpush1.msra.mxu0 0.0
        %740 = vmatprep.subr.mxu0 0.0
        %741 = vmatpush1.msra.mxu0 0.0
        %742 = vmatprep.subr.mxu0 0.0
        %743 = vmatpush1.msra.mxu0 0.0
        %744 = vmatprep.subr.mxu0 0.0
        %745 = vmatpush1.msra.mxu0 0.0
        %746 = vmatprep.subr.mxu0 0.0
        %747 = vmatpush1.msra.mxu0 0.0
        %748 = vmatprep.subr.mxu0 0.0
        %749 = vmatpush1.msra.mxu0 0.0
        %750 = vmatprep.subr.mxu0 0.0
        %751 = vmatpush1.msra.mxu0 0.0
        %752 = vmatprep.subr.mxu0 0.0
        %753 = vmatpush1.msra.mxu0 0.0
        %754 = vmatprep.subr.mxu0 0.0
        %755 = vmatpush1.msra.mxu0 0.0
        %756 = vmatprep.subr.mxu0 0.0
        %757 = vmatpush1.msra.mxu0 0.0
        %758 = vmatprep.subr.mxu0 0.0
        %759 = vmatpush1.msra.mxu0 0.0
        %760 = vmatprep.subr.mxu0 0.0
        %761 = vmatpush1.msra.mxu0 0.0
        %762 = vmatprep.subr.mxu0 0.0
        %763 = vmatpush1.msra.mxu0 0.0
        %764 = vmatprep.subr.mxu0 0.0
        %765 = vmatpush1.msra.mxu0 0.0
        %766 = vmatprep.subr.mxu0 0.0
        %767 = vmatpush1.msra.mxu0 0.0
        %768 = vmatprep.subr.mxu0 0.0
        %769 = vmatpush1.msra.mxu0 0.0
        %770 = vmatprep.subr.mxu0 0.0
        %771 = vmatpush1.msra.mxu0 0.0
        %772 = vmatprep.subr.mxu0 0.0
        %773 = vmatpush1.msra.mxu0 0.0
        %774 = vmatprep.subr.mxu0 0.0
        %775 = vmatpush1.msra.mxu0 0.0
        %776 = vmatprep.subr.mxu0 0.0
        %777 = vmatpush1.msra.mxu0 0.0
        %778 = vmatprep.subr.mxu0 0.0
        %779 = vmatpush1.msra.mxu0 0.0
        %780 = vmatprep.subr.mxu0 0.0
        %781 = vmatpush1.msra.mxu0 0.0
        %782 = vmatprep.subr.mxu0 0.0
        %783 = vmatpush1.msra.mxu0 0.0
        %784 = vmatprep.subr.mxu0 0.0
        %785 = vmatpush1.msra.mxu0 0.0
        %786 = vmatprep.subr.mxu0 0.0
        %787 = vmatpush1.msra.mxu0 0.0
        %788 = vmatprep.mubr.f32.mxu0 0.0
        %789 = vmatmul.mubr.f32.gmra.mrb[0].mxu0 %v518
        %v790 = vpop.f32.mrb[0].mxu0
        %v791 = vadd.f32 %v487, %v790
        %v792 = vpop.f32.mrb[0].mxu0
        %v793 = vadd.f32 %v491, %v792
        %794 = vmatprep.mubr.f32.mxu0 0.0
        %795 = vmatmul.mubr.f32.gmra.mrb[0].mxu0 %v521
        %v796 = vpop.f32.mrb[0].mxu0
        %v797 = vadd.f32 %v487, %v796
        %v798 = vpop.f32.mrb[0].mxu0
        %v799 = vadd.f32 %v491, %v798
        %800 = vmatprep.mubr.f32.mxu0 0.0
        %801 = vmatmul.mubr.f32.gmra.mrb[0].mxu0 %v524
        %v802 = vpop.f32.mrb[0].mxu0
        %v803 = vadd.f32 %v487, %v802
        %v804 = vpop.f32.mrb[0].mxu0
        %v805 = vadd.f32 %v491, %v804
        %806 = vmatprep.mubr.f32.mxu0 0.0
        %807 = vmatmul.mubr.f32.gmra.mrb[0].mxu0 %v527
        %v808 = vpop.f32.mrb[0].mxu0
        %v809 = vadd.f32 %v487, %v808
        %v810 = vpop.f32.mrb[0].mxu0
        %v811 = vadd.f32 %v491, %v810
        %812 = vdwg.mxu0
        %813 = vmatprep.subr.mxu0 %v544
        %814 = vmatpush1.msra.mxu0 %v542
        %815 = vmatprep.subr.mxu0 0.0
        %816 = vmatpush1.msra.mxu0 0.0
        %817 = vmatprep.subr.mxu0 0.0
        %818 = vmatpush1.msra.mxu0 0.0
        %819 = vmatprep.subr.mxu0 0.0
        %820 = vmatpush1.msra.mxu0 0.0
        %821 = vmatprep.subr.mxu0 0.0
        %822 = vmatpush1.msra.mxu0 0.0
        %823 = vmatprep.subr.mxu0 0.0
        %824 = vmatpush1.msra.mxu0 0.0
        %825 = vmatprep.subr.mxu0 0.0
        %826 = vmatpush1.msra.mxu0 0.0
        %827 = vmatprep.subr.mxu0 0.0
        %828 = vmatpush1.msra.mxu0 0.0
        %829 = vmatprep.subr.mxu0 0.0
        %830 = vmatpush1.msra.mxu0 0.0
        %831 = vmatprep.subr.mxu0 0.0
        %832 = vmatpush1.msra.mxu0 0.0
        %833 = vmatprep.subr.mxu0 0.0
        %834 = vmatpush1.msra.mxu0 0.0
        %835 = vmatprep.subr.mxu0 0.0
        %836 = vmatpush1.msra.mxu0 0.0
        %837 = vmatprep.subr.mxu0 0.0
        %838 = vmatpush1.msra.mxu0 0.0
        %839 = vmatprep.subr.mxu0 0.0
        %840 = vmatpush1.msra.mxu0 0.0
        %841 = vmatprep.subr.mxu0 0.0
        %842 = vmatpush1.msra.mxu0 0.0
        %843 = vmatprep.subr.mxu0 0.0
        %844 = vmatpush1.msra.mxu0 0.0
        %845 = vmatprep.subr.mxu0 0.0
        %846 = vmatpush1.msra.mxu0 0.0
        %847 = vmatprep.subr.mxu0 0.0
        %848 = vmatpush1.msra.mxu0 0.0
        %849 = vmatprep.subr.mxu0 0.0
        %850 = vmatpush1.msra.mxu0 0.0
        %851 = vmatprep.subr.mxu0 0.0
        %852 = vmatpush1.msra.mxu0 0.0
        %853 = vmatprep.subr.mxu0 0.0
        %854 = vmatpush1.msra.mxu0 0.0
        %855 = vmatprep.subr.mxu0 0.0
        %856 = vmatpush1.msra.mxu0 0.0
        %857 = vmatprep.subr.mxu0 0.0
        %858 = vmatpush1.msra.mxu0 0.0
        %859 = vmatprep.subr.mxu0 0.0
        %860 = vmatpush1.msra.mxu0 0.0
        %861 = vmatprep.subr.mxu0 0.0
        %862 = vmatpush1.msra.mxu0 0.0
        %863 = vmatprep.subr.mxu0 0.0
        %864 = vmatpush1.msra.mxu0 0.0
        %865 = vmatprep.subr.mxu0 0.0
        %866 = vmatpush1.msra.mxu0 0.0
        %867 = vmatprep.subr.mxu0 0.0
        %868 = vmatpush1.msra.mxu0 0.0
        %869 = vmatprep.subr.mxu0 0.0
        %870 = vmatpush1.msra.mxu0 0.0
        %871 = vmatprep.subr.mxu0 0.0
        %872 = vmatpush1.msra.mxu0 0.0
        %873 = vmatprep.subr.mxu0 0.0
        %874 = vmatpush1.msra.mxu0 0.0
        %875 = vmatprep.subr.mxu0 0.0
        %876 = vmatpush1.msra.mxu0 0.0
        %877 = vmatprep.mubr.f32.mxu0 0.0
        %878 = vmatmul.mubr.f32.gmra.mrb[0].mxu0 %v518
        %v879 = vpop.f32.mrb[0].mxu0
        %v880 = vadd.f32 %v495, %v879
        %v881 = vpop.f32.mrb[0].mxu0
        %v882 = vadd.f32 %v499, %v881
        %883 = vmatprep.mubr.f32.mxu0 0.0
        %884 = vmatmul.mubr.f32.gmra.mrb[0].mxu0 %v521
        %v885 = vpop.f32.mrb[0].mxu0
        %v886 = vadd.f32 %v495, %v885
        %v887 = vpop.f32.mrb[0].mxu0
        %v888 = vadd.f32 %v499, %v887
        %889 = vmatprep.mubr.f32.mxu0 0.0
        %890 = vmatmul.mubr.f32.gmra.mrb[0].mxu0 %v524
        %v891 = vpop.f32.mrb[0].mxu0
        %v892 = vadd.f32 %v495, %v891
        %v893 = vpop.f32.mrb[0].mxu0
        %v894 = vadd.f32 %v499, %v893
        %895 = vmatprep.mubr.f32.mxu0 0.0
        %896 = vmatmul.mubr.f32.gmra.mrb[0].mxu0 %v527
        %v897 = vpop.f32.mrb[0].mxu0
        %v898 = vadd.f32 %v495, %v897
        %v899 = vpop.f32.mrb[0].mxu0
        %v900 = vadd.f32 %v499, %v899
        %901 = vdwg.mxu0
        %v902 = vmax.f32 %v613, 0.0
        %v903 = vmax.f32 %v615, 0.0
        %v904 = vmax.f32 %v702, 0.0
        %v905 = vmax.f32 %v704, 0.0
        %v906 = vmax.f32 %v791, 0.0
        %v907 = vmax.f32 %v793, 0.0
        %v908 = vmax.f32 %v880, 0.0
        %v909 = vmax.f32 %v882, 0.0
        %v910 = vmax.f32 %v619, 0.0
        %v911 = vmax.f32 %v621, 0.0
        %v912 = vmax.f32 %v708, 0.0
        %v913 = vmax.f32 %v710, 0.0
        %v914 = vmax.f32 %v797, 0.0
        %v915 = vmax.f32 %v799, 0.0
        %v916 = vmax.f32 %v886, 0.0
        %v917 = vmax.f32 %v888, 0.0
        %v918 = vmax.f32 %v625, 0.0
        %v919 = vmax.f32 %v627, 0.0
        %v920 = vmax.f32 %v714, 0.0
        %v921 = vmax.f32 %v716, 0.0
        %v922 = vmax.f32 %v803, 0.0
        %v923 = vmax.f32 %v805, 0.0
        %v924 = vmax.f32 %v892, 0.0
        %v925 = vmax.f32 %v894, 0.0
        %v926 = vmax.f32 %v631, 0.0
        %v927 = vmax.f32 %v633, 0.0
        %v928 = vmax.f32 %v720, 0.0
        %v929 = vmax.f32 %v722, 0.0
        %v930 = vmax.f32 %v809, 0.0
        %v931 = vmax.f32 %v811, 0.0
        %v932 = vmax.f32 %v898, 0.0
        %v933 = vmax.f32 %v900, 0.0
        %v934 = vpack.c.bf16 %v910, %v902
        %v935 = vpack.c.bf16 %v911, %v903
        %v936 = vpack.c.bf16 %v912, %v904
        %v937 = vpack.c.bf16 %v913, %v905
        %v938 = vpack.c.bf16 %v926, %v918
        %v939 = vpack.c.bf16 %v927, %v919
        %v940 = vpack.c.bf16 %v928, %v920
        %v941 = vpack.c.bf16 %v929, %v921
        %v942 = vpack.c.bf16 %v914, %v906
        %v943 = vpack.c.bf16 %v915, %v907
        %v944 = vpack.c.bf16 %v916, %v908
        %v945 = vpack.c.bf16 %v917, %v909
        %v946 = vpack.c.bf16 %v930, %v922
        %v947 = vpack.c.bf16 %v931, %v923
        %v948 = vpack.c.bf16 %v932, %v924
        %v949 = vpack.c.bf16 %v933, %v925
        %v950 = vld [vmem:[#allocation8] sm:$0xff]
        %v951 = vld [vmem:[#allocation8 + $0x8] sm:$0xf]
        %v952 = vld [vmem:[#allocation8 + $0xc] sm:$0xff]
        %v953 = vld [vmem:[#allocation8 + $0x14] sm:$0xf]
        %v954 = vld [vmem:[#allocation8 + $0x18] sm:$0xff]
        %v955 = vld [vmem:[#allocation8 + $0x20] sm:$0xf]
        %v956 = vld [vmem:[#allocation8 + $0x24] sm:$0xff]
        %v957 = vld [vmem:[#allocation8 + $0x2c] sm:$0xf]
        %v958 = vld [vmem:[#allocation8 + $0x30] sm:$0xff]
        %v959 = vld [vmem:[#allocation8 + $0x38] sm:$0xf]
        %v960 = vld [vmem:[#allocation8 + $0x3c] sm:$0xff]
        %v961 = vld [vmem:[#allocation8 + $0x44] sm:$0xf]
        %v962 = vld [vmem:[#allocation8 + $0x48] sm:$0xff]
        %v963 = vld [vmem:[#allocation8 + $0x50] sm:$0xf]
        %v964 = vld [vmem:[#allocation8 + $0x54] sm:$0xff]
        %v965 = vld [vmem:[#allocation8 + $0x5c] sm:$0xf]
        %v966 = vld [vmem:[#allocation8 + $0x60] sm:$0xff]
        %v967 = vld [vmem:[#allocation8 + $0x68] sm:$0xf]
        %v968 = vld [vmem:[#allocation8 + $0x6c] sm:$0xff]
        %v969 = vld [vmem:[#allocation8 + $0x74] sm:$0xf]
        %v970 = vld [vmem:[#allocation8 + $0x78] sm:$0xff]
        %v971 = vld [vmem:[#allocation8 + $0x80] sm:$0xf]
        %v972 = vld [vmem:[#allocation8 + $0x84] sm:$0xff]
        %v973 = vld [vmem:[#allocation8 + $0x8c] sm:$0xf]
        %v974 = vld [vmem:[#allocation8 + $0x90] sm:$0xff]
        %v975 = vld [vmem:[#allocation8 + $0x98] sm:$0xf]
        %v976 = vld [vmem:[#allocation8 + $0x9c] sm:$0xff]
        %v977 = vld [vmem:[#allocation8 + $0xa4] sm:$0xf]
        %v978 = vld [vmem:[#allocation8 + $0xa8] sm:$0xff]
        %v979 = vld [vmem:[#allocation8 + $0xb0] sm:$0xf]
        %v980 = vld [vmem:[#allocation8 + $0xb4] sm:$0xff]
        %v981 = vld [vmem:[#allocation8 + $0xbc] sm:$0xf]
        %v982 = vld [vmem:[#allocation8 + $0xc0] sm:$0xff]
        %v983 = vld [vmem:[#allocation8 + $0xc8] sm:$0xf]
        %v984 = vld [vmem:[#allocation8 + $0xcc] sm:$0xff]
        %v985 = vld [vmem:[#allocation8 + $0xd4] sm:$0xf]
        %v986 = vld [vmem:[#allocation8 + $0xd8] sm:$0xff]
        %v987 = vld [vmem:[#allocation8 + $0xe0] sm:$0xf]
        %v988 = vld [vmem:[#allocation8 + $0xe4] sm:$0xff]
        %v989 = vld [vmem:[#allocation8 + $0xec] sm:$0xf]
        %v990 = vld [vmem:[#allocation8 + $0xf0] sm:$0xff]
        %v991 = vld [vmem:[#allocation8 + $0xf8] sm:$0xf]
        %v992 = vld [vmem:[#allocation8 + $0xfc] sm:$0xff]
        %v993 = vld [vmem:[#allocation8 + $0x104] sm:$0xf]
        %v994 = vld [vmem:[#allocation8 + $0x108] sm:$0xff]
        %v995 = vld [vmem:[#allocation8 + $0x110] sm:$0xf]
        %v996 = vld [vmem:[#allocation8 + $0x114] sm:$0xff]
        %v997 = vld [vmem:[#allocation8 + $0x11c] sm:$0xf]
        %v998 = vld [vmem:[#allocation8 + $0x120] sm:$0xff]
        %v999 = vld [vmem:[#allocation8 + $0x128] sm:$0xf]
        %v1000 = vld [vmem:[#allocation8 + $0x12c] sm:$0xff]
        %v1001 = vld [vmem:[#allocation8 + $0x134] sm:$0xf]
        %v1002 = vld [vmem:[#allocation8 + $0x138] sm:$0xff]
        %v1003 = vld [vmem:[#allocation8 + $0x140] sm:$0xf]
        %v1004 = vld [vmem:[#allocation8 + $0x144] sm:$0xff]
        %v1005 = vld [vmem:[#allocation8 + $0x14c] sm:$0xf]
        %v1006 = vld [vmem:[#allocation8 + $0x150] sm:$0xff]
        %v1007 = vld [vmem:[#allocation8 + $0x158] sm:$0xf]
        %v1008 = vld [vmem:[#allocation8 + $0x15c] sm:$0xff]
        %v1009 = vld [vmem:[#allocation8 + $0x164] sm:$0xf]
        %v1010 = vld [vmem:[#allocation8 + $0x168] sm:$0xff]
        %v1011 = vld [vmem:[#allocation8 + $0x170] sm:$0xf]
        %v1012 = vld [vmem:[#allocation8 + $0x174] sm:$0xff]
        %v1013 = vld [vmem:[#allocation8 + $0x17c] sm:$0xf]
        %v1014 = vld [vmem:[#allocation8 + $0x180] sm:$0xff]
        %v1015 = vld [vmem:[#allocation8 + $0x188] sm:$0xf]
        %v1016 = vld [vmem:[#allocation8 + $0x18c] sm:$0xff]
        %v1017 = vld [vmem:[#allocation8 + $0x194] sm:$0xf]
        %v1018 = vld [vmem:[#allocation8 + $0x198] sm:$0xff]
        %v1019 = vld [vmem:[#allocation8 + $0x1a0] sm:$0xf]
        %v1020 = vld [vmem:[#allocation8 + $0x1a4] sm:$0xff]
        %v1021 = vld [vmem:[#allocation8 + $0x1ac] sm:$0xf]
        %v1022 = vld [vmem:[#allocation8 + $0x1b0] sm:$0xff]
        %v1023 = vld [vmem:[#allocation8 + $0x1b8] sm:$0xf]
        %v1024 = vld [vmem:[#allocation8 + $0x1bc] sm:$0xff]
        %v1025 = vld [vmem:[#allocation8 + $0x1c4] sm:$0xf]
        %v1026 = vld [vmem:[#allocation8 + $0x1c8] sm:$0xff]
        %v1027 = vld [vmem:[#allocation8 + $0x1d0] sm:$0xf]
        %v1028 = vld [vmem:[#allocation8 + $0x1d4] sm:$0xff]
        %v1029 = vld [vmem:[#allocation8 + $0x1dc] sm:$0xf]
        %v1030 = vld [vmem:[#allocation8 + $0x1e0] sm:$0xff]
        %v1031 = vld [vmem:[#allocation8 + $0x1e8] sm:$0xf]
        %v1032 = vld [vmem:[#allocation8 + $0x1ec] sm:$0xff]
        %v1033 = vld [vmem:[#allocation8 + $0x1f4] sm:$0xf]
        %v1034 = vld [vmem:[#allocation8 + $0x1f8] sm:$0xff]
        %v1035 = vld [vmem:[#allocation8 + $0x200] sm:$0xf]
        %v1036 = vld [vmem:[#allocation8 + $0x204] sm:$0xff]
        %v1037 = vld [vmem:[#allocation8 + $0x20c] sm:$0xf]
        %v1038 = vld [vmem:[#allocation8 + $0x210] sm:$0xff]
        %v1039 = vld [vmem:[#allocation8 + $0x218] sm:$0xf]
        %v1040 = vld [vmem:[#allocation8 + $0x21c] sm:$0xff]
        %v1041 = vld [vmem:[#allocation8 + $0x224] sm:$0xf]
        %v1042 = vld [vmem:[#allocation8 + $0x228] sm:$0xff]
        %v1043 = vld [vmem:[#allocation8 + $0x230] sm:$0xf]
        %v1044 = vld [vmem:[#allocation8 + $0x234] sm:$0xff]
        %v1045 = vld [vmem:[#allocation8 + $0x23c] sm:$0xf]
        %v1046 = vld [vmem:[#allocation8 + $0x240] sm:$0xff]
        %v1047 = vld [vmem:[#allocation8 + $0x248] sm:$0xf]
        %v1048 = vld [vmem:[#allocation8 + $0x24c] sm:$0xff]
        %v1049 = vld [vmem:[#allocation8 + $0x254] sm:$0xf]
        %v1050 = vld [vmem:[#allocation8 + $0x258] sm:$0xff]
        %v1051 = vld [vmem:[#allocation8 + $0x260] sm:$0xf]
        %v1052 = vld [vmem:[#allocation8 + $0x264] sm:$0xff]
        %v1053 = vld [vmem:[#allocation8 + $0x26c] sm:$0xf]
        %v1054 = vld [vmem:[#allocation8 + $0x270] sm:$0xff]
        %v1055 = vld [vmem:[#allocation8 + $0x278] sm:$0xf]
        %v1056 = vld [vmem:[#allocation8 + $0x27c] sm:$0xff]
        %v1057 = vld [vmem:[#allocation8 + $0x284] sm:$0xf]
        %v1058 = vld [vmem:[#allocation8 + $0x288] sm:$0xff]
        %v1059 = vld [vmem:[#allocation8 + $0x290] sm:$0xf]
        %v1060 = vld [vmem:[#allocation8 + $0x294] sm:$0xff]
        %v1061 = vld [vmem:[#allocation8 + $0x29c] sm:$0xf]
        %v1062 = vld [vmem:[#allocation8 + $0x2a0] sm:$0xff]
        %v1063 = vld [vmem:[#allocation8 + $0x2a8] sm:$0xf]
        %v1064 = vld [vmem:[#allocation8 + $0x2ac] sm:$0xff]
        %v1065 = vld [vmem:[#allocation8 + $0x2b4] sm:$0xf]
        %v1066 = vld [vmem:[#allocation8 + $0x2b8] sm:$0xff]
        %v1067 = vld [vmem:[#allocation8 + $0x2c0] sm:$0xf]
        %v1068 = vld [vmem:[#allocation8 + $0x2c4] sm:$0xff]
        %v1069 = vld [vmem:[#allocation8 + $0x2cc] sm:$0xf]
        %v1070 = vld [vmem:[#allocation8 + $0x2d0] sm:$0xff]
        %v1071 = vld [vmem:[#allocation8 + $0x2d8] sm:$0xf]
        %v1072 = vld [vmem:[#allocation8 + $0x2dc] sm:$0xff]
        %v1073 = vld [vmem:[#allocation8 + $0x2e4] sm:$0xf]
        %v1074 = vld [vmem:[#allocation8 + $0x2e8] sm:$0xff]
        %v1075 = vld [vmem:[#allocation8 + $0x2f0] sm:$0xf]
        %v1076 = vld [vmem:[#allocation8 + $0x2f4] sm:$0xff]
        %v1077 = vld [vmem:[#allocation8 + $0x2fc] sm:$0xf]
        %v1078 = vld [vmem:[#allocation10] sm:$0x7]
        %v1080 = vlaneseq
        %v1081 = vshrl.u32 %v1080, 7
        %v1082 = vsub.s32 0, %v1081
        %v1083 = vrot.slane %v1078, %v1082
        %v1084 = vlaneseq
        %v1085 = vshrl.u32 %v1084, 7
        %v1086 = vsub.s32 1, %v1085
        %v1087 = vrot.slane %v1078, %v1086
        %v1088 = vlaneseq
        %v1089 = vshrl.u32 %v1088, 7
        %v1090 = vsub.s32 2, %v1089
        %v1091 = vrot.slane %v1078, %v1090
        %v1223 = vunpack.c.l.b16 %v950
        %v1224 = vunpack.c.h.b16 %v950
        %v1225 = vunpack.c.l.b16 %v951
        %v1226 = vunpack.c.l.b16 %v952
        %v1227 = vunpack.c.h.b16 %v952
        %v1228 = vunpack.c.l.b16 %v953
        %v1229 = vunpack.c.l.b16 %v954
        %v1230 = vunpack.c.h.b16 %v954
        %v1231 = vunpack.c.l.b16 %v955
        %v1232 = vunpack.c.l.b16 %v956
        %v1233 = vunpack.c.h.b16 %v956
        %v1234 = vunpack.c.l.b16 %v957
        %v1235 = vunpack.c.l.b16 %v958
        %v1236 = vunpack.c.h.b16 %v958
        %v1237 = vunpack.c.l.b16 %v959
        %v1238 = vunpack.c.l.b16 %v960
        %v1239 = vunpack.c.h.b16 %v960
        %v1240 = vunpack.c.l.b16 %v961
        %v1241 = vunpack.c.l.b16 %v962
        %v1242 = vunpack.c.h.b16 %v962
        %v1243 = vunpack.c.l.b16 %v963
        %v1244 = vunpack.c.l.b16 %v964
        %v1245 = vunpack.c.h.b16 %v964
        %v1246 = vunpack.c.l.b16 %v965
        %v1247 = vunpack.c.l.b16 %v966
        %v1248 = vunpack.c.h.b16 %v966
        %v1249 = vunpack.c.l.b16 %v967
        %v1250 = vunpack.c.l.b16 %v968
        %v1251 = vunpack.c.h.b16 %v968
        %v1252 = vunpack.c.l.b16 %v969
        %v1253 = vunpack.c.l.b16 %v970
        %v1254 = vunpack.c.h.b16 %v970
        %v1255 = vunpack.c.l.b16 %v971
        %v1256 = vunpack.c.l.b16 %v972
        %v1257 = vunpack.c.h.b16 %v972
        %v1258 = vunpack.c.l.b16 %v973
        %v1259 = vunpack.c.l.b16 %v974
        %v1260 = vunpack.c.h.b16 %v974
        %v1261 = vunpack.c.l.b16 %v975
        %v1262 = vunpack.c.l.b16 %v976
        %v1263 = vunpack.c.h.b16 %v976
        %v1264 = vunpack.c.l.b16 %v977
        %v1265 = vunpack.c.l.b16 %v978
        %v1266 = vunpack.c.h.b16 %v978
        %v1267 = vunpack.c.l.b16 %v979
        %v1268 = vunpack.c.l.b16 %v980
        %v1269 = vunpack.c.h.b16 %v980
        %v1270 = vunpack.c.l.b16 %v981
        %v1271 = vunpack.c.l.b16 %v982
        %v1272 = vunpack.c.h.b16 %v982
        %v1273 = vunpack.c.l.b16 %v983
        %v1274 = vunpack.c.l.b16 %v984
        %v1275 = vunpack.c.h.b16 %v984
        %v1276 = vunpack.c.l.b16 %v985
        %v1277 = vunpack.c.l.b16 %v986
        %v1278 = vunpack.c.h.b16 %v986
        %v1279 = vunpack.c.l.b16 %v987
        %v1280 = vunpack.c.l.b16 %v988
        %v1281 = vunpack.c.h.b16 %v988
        %v1282 = vunpack.c.l.b16 %v989
        %v1283 = vunpack.c.l.b16 %v990
        %v1284 = vunpack.c.h.b16 %v990
        %v1285 = vunpack.c.l.b16 %v991
        %v1286 = vunpack.c.l.b16 %v992
        %v1287 = vunpack.c.h.b16 %v992
        %v1288 = vunpack.c.l.b16 %v993
        %v1289 = vunpack.c.l.b16 %v994
        %v1290 = vunpack.c.h.b16 %v994
        %v1291 = vunpack.c.l.b16 %v995
        %v1292 = vunpack.c.l.b16 %v996
        %v1293 = vunpack.c.h.b16 %v996
        %v1294 = vunpack.c.l.b16 %v997
        %v1295 = vunpack.c.l.b16 %v998
        %v1296 = vunpack.c.h.b16 %v998
        %v1297 = vunpack.c.l.b16 %v999
        %v1298 = vunpack.c.l.b16 %v1000
        %v1299 = vunpack.c.h.b16 %v1000
        %v1300 = vunpack.c.l.b16 %v1001
        %v1301 = vunpack.c.l.b16 %v1002
        %v1302 = vunpack.c.h.b16 %v1002
        %v1303 = vunpack.c.l.b16 %v1003
        %v1304 = vunpack.c.l.b16 %v1004
        %v1305 = vunpack.c.h.b16 %v1004
        %v1306 = vunpack.c.l.b16 %v1005
        %v1307 = vunpack.c.l.b16 %v1006
        %v1308 = vunpack.c.h.b16 %v1006
        %v1309 = vunpack.c.l.b16 %v1007
        %v1310 = vunpack.c.l.b16 %v1008
        %v1311 = vunpack.c.h.b16 %v1008
        %v1312 = vunpack.c.l.b16 %v1009
        %v1313 = vunpack.c.l.b16 %v1010
        %v1314 = vunpack.c.h.b16 %v1010
        %v1315 = vunpack.c.l.b16 %v1011
        %v1316 = vunpack.c.l.b16 %v1012
        %v1317 = vunpack.c.h.b16 %v1012
        %v1318 = vunpack.c.l.b16 %v1013
        %v1319 = vunpack.c.l.b16 %v1014
        %v1320 = vunpack.c.h.b16 %v1014
        %v1321 = vunpack.c.l.b16 %v1015
        %v1322 = vunpack.c.l.b16 %v1016
        %v1323 = vunpack.c.h.b16 %v1016
        %v1324 = vunpack.c.l.b16 %v1017
        %v1325 = vunpack.c.l.b16 %v1018
        %v1326 = vunpack.c.h.b16 %v1018
        %v1327 = vunpack.c.l.b16 %v1019
        %v1328 = vunpack.c.l.b16 %v1020
        %v1329 = vunpack.c.h.b16 %v1020
        %v1330 = vunpack.c.l.b16 %v1021
        %v1331 = vunpack.c.l.b16 %v1022
        %v1332 = vunpack.c.h.b16 %v1022
        %v1333 = vunpack.c.l.b16 %v1023
        %v1334 = vunpack.c.l.b16 %v1024
        %v1335 = vunpack.c.h.b16 %v1024
        %v1336 = vunpack.c.l.b16 %v1025
        %v1337 = vunpack.c.l.b16 %v1026
        %v1338 = vunpack.c.h.b16 %v1026
        %v1339 = vunpack.c.l.b16 %v1027
        %v1340 = vunpack.c.l.b16 %v1028
        %v1341 = vunpack.c.h.b16 %v1028
        %v1342 = vunpack.c.l.b16 %v1029
        %v1343 = vunpack.c.l.b16 %v1030
        %v1344 = vunpack.c.h.b16 %v1030
        %v1345 = vunpack.c.l.b16 %v1031
        %v1346 = vunpack.c.l.b16 %v1032
        %v1347 = vunpack.c.h.b16 %v1032
        %v1348 = vunpack.c.l.b16 %v1033
        %v1349 = vunpack.c.l.b16 %v1034
        %v1350 = vunpack.c.h.b16 %v1034
        %v1351 = vunpack.c.l.b16 %v1035
        %v1352 = vunpack.c.l.b16 %v1036
        %v1353 = vunpack.c.h.b16 %v1036
        %v1354 = vunpack.c.l.b16 %v1037
        %v1355 = vunpack.c.l.b16 %v1038
        %v1356 = vunpack.c.h.b16 %v1038
        %v1357 = vunpack.c.l.b16 %v1039
        %v1358 = vunpack.c.l.b16 %v1040
        %v1359 = vunpack.c.h.b16 %v1040
        %v1360 = vunpack.c.l.b16 %v1041
        %v1361 = vunpack.c.l.b16 %v1042
        %v1362 = vunpack.c.h.b16 %v1042
        %v1363 = vunpack.c.l.b16 %v1043
        %v1364 = vunpack.c.l.b16 %v1044
        %v1365 = vunpack.c.h.b16 %v1044
        %v1366 = vunpack.c.l.b16 %v1045
        %v1367 = vunpack.c.l.b16 %v1046
        %v1368 = vunpack.c.h.b16 %v1046
        %v1369 = vunpack.c.l.b16 %v1047
        %v1370 = vunpack.c.l.b16 %v1048
        %v1371 = vunpack.c.h.b16 %v1048
        %v1372 = vunpack.c.l.b16 %v1049
        %v1373 = vunpack.c.l.b16 %v1050
        %v1374 = vunpack.c.h.b16 %v1050
        %v1375 = vunpack.c.l.b16 %v1051
        %v1376 = vunpack.c.l.b16 %v1052
        %v1377 = vunpack.c.h.b16 %v1052
        %v1378 = vunpack.c.l.b16 %v1053
        %v1379 = vunpack.c.l.b16 %v1054
        %v1380 = vunpack.c.h.b16 %v1054
        %v1381 = vunpack.c.l.b16 %v1055
        %v1382 = vunpack.c.l.b16 %v1056
        %v1383 = vunpack.c.h.b16 %v1056
        %v1384 = vunpack.c.l.b16 %v1057
        %v1385 = vunpack.c.l.b16 %v1058
        %v1386 = vunpack.c.h.b16 %v1058
        %v1387 = vunpack.c.l.b16 %v1059
        %v1388 = vunpack.c.l.b16 %v1060
        %v1389 = vunpack.c.h.b16 %v1060
        %v1390 = vunpack.c.l.b16 %v1061
        %v1391 = vunpack.c.l.b16 %v1062
        %v1392 = vunpack.c.h.b16 %v1062
        %v1393 = vunpack.c.l.b16 %v1063
        %v1394 = vunpack.c.l.b16 %v1064
        %v1395 = vunpack.c.h.b16 %v1064
        %v1396 = vunpack.c.l.b16 %v1065
        %v1397 = vunpack.c.l.b16 %v1066
        %v1398 = vunpack.c.h.b16 %v1066
        %v1399 = vunpack.c.l.b16 %v1067
        %v1400 = vunpack.c.l.b16 %v1068
        %v1401 = vunpack.c.h.b16 %v1068
        %v1402 = vunpack.c.l.b16 %v1069
        %v1403 = vunpack.c.l.b16 %v1070
        %v1404 = vunpack.c.h.b16 %v1070
        %v1405 = vunpack.c.l.b16 %v1071
        %v1406 = vunpack.c.l.b16 %v1072
        %v1407 = vunpack.c.h.b16 %v1072
        %v1408 = vunpack.c.l.b16 %v1073
        %v1409 = vunpack.c.l.b16 %v1074
        %v1410 = vunpack.c.h.b16 %v1074
        %v1411 = vunpack.c.l.b16 %v1075
        %v1412 = vunpack.c.l.b16 %v1076
        %v1413 = vunpack.c.h.b16 %v1076
        %v1414 = vunpack.c.l.b16 %v1077
        %v1415 = vpack.c.b16 %v1226, %v1223
        %v1416 = vpack.c.b16 %v1227, %v1224
        %v1417 = vpack.c.b16 %v1228, %v1225
        %v1418 = vpack.c.b16 %v1232, %v1229
        %v1419 = vpack.c.b16 %v1233, %v1230
        %v1420 = vpack.c.b16 %v1234, %v1231
        %v1421 = vpack.c.b16 %v1238, %v1235
        %v1422 = vpack.c.b16 %v1239, %v1236
        %v1423 = vpack.c.b16 %v1240, %v1237
        %v1424 = vpack.c.b16 %v1244, %v1241
        %v1425 = vpack.c.b16 %v1245, %v1242
        %v1426 = vpack.c.b16 %v1246, %v1243
        %v1427 = vpack.c.b16 %v1250, %v1247
        %v1428 = vpack.c.b16 %v1251, %v1248
        %v1429 = vpack.c.b16 %v1252, %v1249
        %v1430 = vpack.c.b16 %v1256, %v1253
        %v1431 = vpack.c.b16 %v1257, %v1254
        %v1432 = vpack.c.b16 %v1258, %v1255
        %v1433 = vpack.c.b16 %v1262, %v1259
        %v1434 = vpack.c.b16 %v1263, %v1260
        %v1435 = vpack.c.b16 %v1264, %v1261
        %v1436 = vpack.c.b16 %v1268, %v1265
        %v1437 = vpack.c.b16 %v1269, %v1266
        %v1438 = vpack.c.b16 %v1270, %v1267
        %v1439 = vpack.c.b16 %v1274, %v1271
        %v1440 = vpack.c.b16 %v1275, %v1272
        %v1441 = vpack.c.b16 %v1276, %v1273
        %v1442 = vpack.c.b16 %v1280, %v1277
        %v1443 = vpack.c.b16 %v1281, %v1278
        %v1444 = vpack.c.b16 %v1282, %v1279
        %v1445 = vpack.c.b16 %v1286, %v1283
        %v1446 = vpack.c.b16 %v1287, %v1284
        %v1447 = vpack.c.b16 %v1288, %v1285
        %v1448 = vpack.c.b16 %v1292, %v1289
        %v1449 = vpack.c.b16 %v1293, %v1290
        %v1450 = vpack.c.b16 %v1294, %v1291
        %v1451 = vpack.c.b16 %v1298, %v1295
        %v1452 = vpack.c.b16 %v1299, %v1296
        %v1453 = vpack.c.b16 %v1300, %v1297
        %v1454 = vpack.c.b16 %v1304, %v1301
        %v1455 = vpack.c.b16 %v1305, %v1302
        %v1456 = vpack.c.b16 %v1306, %v1303
        %v1457 = vpack.c.b16 %v1310, %v1307
        %v1458 = vpack.c.b16 %v1311, %v1308
        %v1459 = vpack.c.b16 %v1312, %v1309
        %v1460 = vpack.c.b16 %v1316, %v1313
        %v1461 = vpack.c.b16 %v1317, %v1314
        %v1462 = vpack.c.b16 %v1318, %v1315
        %v1463 = vpack.c.b16 %v1322, %v1319
        %v1464 = vpack.c.b16 %v1323, %v1320
        %v1465 = vpack.c.b16 %v1324, %v1321
        %v1466 = vpack.c.b16 %v1328, %v1325
        %v1467 = vpack.c.b16 %v1329, %v1326
        %v1468 = vpack.c.b16 %v1330, %v1327
        %v1469 = vpack.c.b16 %v1334, %v1331
        %v1470 = vpack.c.b16 %v1335, %v1332
        %v1471 = vpack.c.b16 %v1336, %v1333
        %v1472 = vpack.c.b16 %v1340, %v1337
        %v1473 = vpack.c.b16 %v1341, %v1338
        %v1474 = vpack.c.b16 %v1342, %v1339
        %v1475 = vpack.c.b16 %v1346, %v1343
        %v1476 = vpack.c.b16 %v1347, %v1344
        %v1477 = vpack.c.b16 %v1348, %v1345
        %v1478 = vpack.c.b16 %v1352, %v1349
        %v1479 = vpack.c.b16 %v1353, %v1350
        %v1480 = vpack.c.b16 %v1354, %v1351
        %v1481 = vpack.c.b16 %v1358, %v1355
        %v1482 = vpack.c.b16 %v1359, %v1356
        %v1483 = vpack.c.b16 %v1360, %v1357
        %v1484 = vpack.c.b16 %v1364, %v1361
        %v1485 = vpack.c.b16 %v1365, %v1362
        %v1486 = vpack.c.b16 %v1366, %v1363
        %v1487 = vpack.c.b16 %v1370, %v1367
        %v1488 = vpack.c.b16 %v1371, %v1368
        %v1489 = vpack.c.b16 %v1372, %v1369
        %v1490 = vpack.c.b16 %v1376, %v1373
        %v1491 = vpack.c.b16 %v1377, %v1374
        %v1492 = vpack.c.b16 %v1378, %v1375
        %v1493 = vpack.c.b16 %v1382, %v1379
        %v1494 = vpack.c.b16 %v1383, %v1380
        %v1495 = vpack.c.b16 %v1384, %v1381
        %v1496 = vpack.c.b16 %v1388, %v1385
        %v1497 = vpack.c.b16 %v1389, %v1386
        %v1498 = vpack.c.b16 %v1390, %v1387
        %v1499 = vpack.c.b16 %v1394, %v1391
        %v1500 = vpack.c.b16 %v1395, %v1392
        %v1501 = vpack.c.b16 %v1396, %v1393
        %v1502 = vpack.c.b16 %v1400, %v1397
        %v1503 = vpack.c.b16 %v1401, %v1398
        %v1504 = vpack.c.b16 %v1402, %v1399
        %v1505 = vpack.c.b16 %v1406, %v1403
        %v1506 = vpack.c.b16 %v1407, %v1404
        %v1507 = vpack.c.b16 %v1408, %v1405
        %v1508 = vpack.c.b16 %v1412, %v1409
        %v1509 = vpack.c.b16 %v1413, %v1410
        %v1510 = vpack.c.b16 %v1414, %v1411
        %1607 = vmatprep.subr.bf16.mxu0 %v1416
        %1608 = vmatpush1.bf16.msra.mxu0 %v1415
        %1609 = vmatprep.subr.bf16.mxu0 %v1419
        %1610 = vmatpush1.bf16.msra.mxu0 %v1418
        %1611 = vmatprep.subr.bf16.mxu0 %v1422
        %1612 = vmatpush1.bf16.msra.mxu0 %v1421
        %1613 = vmatprep.subr.bf16.mxu0 %v1425
        %1614 = vmatpush1.bf16.msra.mxu0 %v1424
        %1615 = vmatprep.subr.bf16.mxu0 %v1428
        %1616 = vmatpush1.bf16.msra.mxu0 %v1427
        %1617 = vmatprep.subr.bf16.mxu0 %v1431
        %1618 = vmatpush1.bf16.msra.mxu0 %v1430
        %1619 = vmatprep.subr.bf16.mxu0 %v1434
        %1620 = vmatpush1.bf16.msra.mxu0 %v1433
        %1621 = vmatprep.subr.bf16.mxu0 %v1437
        %1622 = vmatpush1.bf16.msra.mxu0 %v1436
        %1623 = vmatprep.subr.bf16.mxu0 %v1440
        %1624 = vmatpush1.bf16.msra.mxu0 %v1439
        %1625 = vmatprep.subr.bf16.mxu0 %v1443
        %1626 = vmatpush1.bf16.msra.mxu0 %v1442
        %1627 = vmatprep.subr.bf16.mxu0 %v1446
        %1628 = vmatpush1.bf16.msra.mxu0 %v1445
        %1629 = vmatprep.subr.bf16.mxu0 %v1449
        %1630 = vmatpush1.bf16.msra.mxu0 %v1448
        %1631 = vmatprep.subr.bf16.mxu0 %v1452
        %1632 = vmatpush1.bf16.msra.mxu0 %v1451
        %1633 = vmatprep.subr.bf16.mxu0 %v1455
        %1634 = vmatpush1.bf16.msra.mxu0 %v1454
        %1635 = vmatprep.subr.bf16.mxu0 %v1458
        %1636 = vmatpush1.bf16.msra.mxu0 %v1457
        %1637 = vmatprep.subr.bf16.mxu0 %v1461
        %1638 = vmatpush1.bf16.msra.mxu0 %v1460
        %1639 = vmatprep.mubr.bf16.mxu0 %v935
        %1640 = vmatmul.mubr.bf16.gmra.mrb[0].mxu0 %v934
        %v1641 = vpop.f32.mrb[0].mxu0
        %v1642 = vadd.f32 %v1083, %v1641
        %v1643 = vpop.f32.mrb[0].mxu0
        %v1644 = vadd.f32 %v1087, %v1643
        %v1645 = vpop.f32.mrb[0].mxu0
        %v1646 = vadd.f32 %v1083, %v1645
        %v1647 = vpop.f32.mrb[0].mxu0
        %v1648 = vadd.f32 %v1087, %v1647
        %1649 = vmatprep.mubr.bf16.mxu0 %v939
        %1650 = vmatmul.mubr.bf16.gmra.mrb[0].mxu0 %v938
        %v1651 = vpop.f32.mrb[0].mxu0
        %v1652 = vadd.f32 %v1083, %v1651
        %v1653 = vpop.f32.mrb[0].mxu0
        %v1654 = vadd.f32 %v1087, %v1653
        %v1655 = vpop.f32.mrb[0].mxu0
        %v1656 = vadd.f32 %v1083, %v1655
        %v1657 = vpop.f32.mrb[0].mxu0
        %v1658 = vadd.f32 %v1087, %v1657
        %1659 = vdwg.mxu0
        %1660 = vmatprep.subr.bf16.mxu0 %v1464
        %1661 = vmatpush1.bf16.msra.mxu0 %v1463
        %1662 = vmatprep.subr.bf16.mxu0 %v1467
        %1663 = vmatpush1.bf16.msra.mxu0 %v1466
        %1664 = vmatprep.subr.bf16.mxu0 %v1470
        %1665 = vmatpush1.bf16.msra.mxu0 %v1469
        %1666 = vmatprep.subr.bf16.mxu0 %v1473
        %1667 = vmatpush1.bf16.msra.mxu0 %v1472
        %1668 = vmatprep.subr.bf16.mxu0 %v1476
        %1669 = vmatpush1.bf16.msra.mxu0 %v1475
        %1670 = vmatprep.subr.bf16.mxu0 %v1479
        %1671 = vmatpush1.bf16.msra.mxu0 %v1478
        %1672 = vmatprep.subr.bf16.mxu0 %v1482
        %1673 = vmatpush1.bf16.msra.mxu0 %v1481
        %1674 = vmatprep.subr.bf16.mxu0 %v1485
        %1675 = vmatpush1.bf16.msra.mxu0 %v1484
        %1676 = vmatprep.subr.bf16.mxu0 %v1488
        %1677 = vmatpush1.bf16.msra.mxu0 %v1487
        %1678 = vmatprep.subr.bf16.mxu0 %v1491
        %1679 = vmatpush1.bf16.msra.mxu0 %v1490
        %1680 = vmatprep.subr.bf16.mxu0 %v1494
        %1681 = vmatpush1.bf16.msra.mxu0 %v1493
        %1682 = vmatprep.subr.bf16.mxu0 %v1497
        %1683 = vmatpush1.bf16.msra.mxu0 %v1496
        %1684 = vmatprep.subr.bf16.mxu0 %v1500
        %1685 = vmatpush1.bf16.msra.mxu0 %v1499
        %1686 = vmatprep.subr.bf16.mxu0 %v1503
        %1687 = vmatpush1.bf16.msra.mxu0 %v1502
        %1688 = vmatprep.subr.bf16.mxu0 %v1506
        %1689 = vmatpush1.bf16.msra.mxu0 %v1505
        %1690 = vmatprep.subr.bf16.mxu0 %v1509
        %1691 = vmatpush1.bf16.msra.mxu0 %v1508
        %1692 = vmatprep.mubr.bf16.mxu0 %v937
        %1693 = vmatmul.mubr.bf16.gmra.mrb[0].mxu0 %v936
        %v1694 = vpop.f32.mrb[0].mxu0
        %v1695 = vadd.f32 %v1642, %v1694
        %v1696 = vpop.f32.mrb[0].mxu0
        %v1697 = vadd.f32 %v1644, %v1696
        %v1698 = vpop.f32.mrb[0].mxu0
        %v1699 = vadd.f32 %v1646, %v1698
        %v1700 = vpop.f32.mrb[0].mxu0
        %v1701 = vadd.f32 %v1648, %v1700
        %1702 = vmatprep.mubr.bf16.mxu0 %v941
        %1703 = vmatmul.mubr.bf16.gmra.mrb[0].mxu0 %v940
        %v1704 = vpop.f32.mrb[0].mxu0
        %v1705 = vadd.f32 %v1652, %v1704
        %v1706 = vpop.f32.mrb[0].mxu0
        %v1707 = vadd.f32 %v1654, %v1706
        %v1708 = vpop.f32.mrb[0].mxu0
        %v1709 = vadd.f32 %v1656, %v1708
        %v1710 = vpop.f32.mrb[0].mxu0
        %v1711 = vadd.f32 %v1658, %v1710
        %1712 = vdwg.mxu0
        %1713 = vmatprep.subr.bf16.mxu0 0
        %1714 = vmatpush1.bf16.msra.mxu0 %v1417
        %1715 = vmatprep.subr.bf16.mxu0 0
        %1716 = vmatpush1.bf16.msra.mxu0 %v1420
        %1717 = vmatprep.subr.bf16.mxu0 0
        %1718 = vmatpush1.bf16.msra.mxu0 %v1423
        %1719 = vmatprep.subr.bf16.mxu0 0
        %1720 = vmatpush1.bf16.msra.mxu0 %v1426
        %1721 = vmatprep.subr.bf16.mxu0 0
        %1722 = vmatpush1.bf16.msra.mxu0 %v1429
        %1723 = vmatprep.subr.bf16.mxu0 0
        %1724 = vmatpush1.bf16.msra.mxu0 %v1432
        %1725 = vmatprep.subr.bf16.mxu0 0
        %1726 = vmatpush1.bf16.msra.mxu0 %v1435
        %1727 = vmatprep.subr.bf16.mxu0 0
        %1728 = vmatpush1.bf16.msra.mxu0 %v1438
        %1729 = vmatprep.subr.bf16.mxu0 0
        %1730 = vmatpush1.bf16.msra.mxu0 %v1441
        %1731 = vmatprep.subr.bf16.mxu0 0
        %1732 = vmatpush1.bf16.msra.mxu0 %v1444
        %1733 = vmatprep.subr.bf16.mxu0 0
        %1734 = vmatpush1.bf16.msra.mxu0 %v1447
        %1735 = vmatprep.subr.bf16.mxu0 0
        %1736 = vmatpush1.bf16.msra.mxu0 %v1450
        %1737 = vmatprep.subr.bf16.mxu0 0
        %1738 = vmatpush1.bf16.msra.mxu0 %v1453
        %1739 = vmatprep.subr.bf16.mxu0 0
        %1740 = vmatpush1.bf16.msra.mxu0 %v1456
        %1741 = vmatprep.subr.bf16.mxu0 0
        %1742 = vmatpush1.bf16.msra.mxu0 %v1459
        %1743 = vmatprep.subr.bf16.mxu0 0
        %1744 = vmatpush1.bf16.msra.mxu0 %v1462
        %1745 = vmatprep.mubr.bf16.mxu0 %v935
        %1746 = vmatmul.mubr.bf16.gmra.mrb[0].mxu0 %v934
        %v1747 = vpop.f32.mrb[0].mxu0
        %v1748 = vadd.f32 %v1091, %v1747
        %v1749 = vpop.f32.mrb[0].mxu0
        %v1750 = vpop.f32.mrb[0].mxu0
        %v1751 = vadd.f32 %v1091, %v1750
        %v1752 = vpop.f32.mrb[0].mxu0
        %1753 = vmatprep.mubr.bf16.mxu0 %v939
        %1754 = vmatmul.mubr.bf16.gmra.mrb[0].mxu0 %v938
        %v1755 = vpop.f32.mrb[0].mxu0
        %v1756 = vadd.f32 %v1091, %v1755
        %v1757 = vpop.f32.mrb[0].mxu0
        %v1758 = vpop.f32.mrb[0].mxu0
        %v1759 = vadd.f32 %v1091, %v1758
        %v1760 = vpop.f32.mrb[0].mxu0
        %1761 = vdwg.mxu0
        %1762 = vmatprep.subr.bf16.mxu0 0
        %1763 = vmatpush1.bf16.msra.mxu0 %v1465
        %1764 = vmatprep.subr.bf16.mxu0 0
        %1765 = vmatpush1.bf16.msra.mxu0 %v1468
        %1766 = vmatprep.subr.bf16.mxu0 0
        %1767 = vmatpush1.bf16.msra.mxu0 %v1471
        %1768 = vmatprep.subr.bf16.mxu0 0
        %1769 = vmatpush1.bf16.msra.mxu0 %v1474
        %1770 = vmatprep.subr.bf16.mxu0 0
        %1771 = vmatpush1.bf16.msra.mxu0 %v1477
        %1772 = vmatprep.subr.bf16.mxu0 0
        %1773 = vmatpush1.bf16.msra.mxu0 %v1480
        %1774 = vmatprep.subr.bf16.mxu0 0
        %1775 = vmatpush1.bf16.msra.mxu0 %v1483
        %1776 = vmatprep.subr.bf16.mxu0 0
        %1777 = vmatpush1.bf16.msra.mxu0 %v1486
        %1778 = vmatprep.subr.bf16.mxu0 0
        %1779 = vmatpush1.bf16.msra.mxu0 %v1489
        %1780 = vmatprep.subr.bf16.mxu0 0
        %1781 = vmatpush1.bf16.msra.mxu0 %v1492
        %1782 = vmatprep.subr.bf16.mxu0 0
        %1783 = vmatpush1.bf16.msra.mxu0 %v1495
        %1784 = vmatprep.subr.bf16.mxu0 0
        %1785 = vmatpush1.bf16.msra.mxu0 %v1498
        %1786 = vmatprep.subr.bf16.mxu0 0
        %1787 = vmatpush1.bf16.msra.mxu0 %v1501
        %1788 = vmatprep.subr.bf16.mxu0 0
        %1789 = vmatpush1.bf16.msra.mxu0 %v1504
        %1790 = vmatprep.subr.bf16.mxu0 0
        %1791 = vmatpush1.bf16.msra.mxu0 %v1507
        %1792 = vmatprep.subr.bf16.mxu0 0
        %1793 = vmatpush1.bf16.msra.mxu0 %v1510
        %1794 = vmatprep.mubr.bf16.mxu0 %v937
        %1795 = vmatmul.mubr.bf16.gmra.mrb[0].mxu0 %v936
        %v1796 = vpop.f32.mrb[0].mxu0
        %v1797 = vadd.f32 %v1748, %v1796
        %v1798 = vpop.f32.mrb[0].mxu0
        %v1799 = vpop.f32.mrb[0].mxu0
        %v1800 = vadd.f32 %v1751, %v1799
        %v1801 = vpop.f32.mrb[0].mxu0
        %1802 = vmatprep.mubr.bf16.mxu0 %v941
        %1803 = vmatmul.mubr.bf16.gmra.mrb[0].mxu0 %v940
        %v1804 = vpop.f32.mrb[0].mxu0
        %v1805 = vadd.f32 %v1756, %v1804
        %v1806 = vpop.f32.mrb[0].mxu0
        %v1807 = vpop.f32.mrb[0].mxu0
        %v1808 = vadd.f32 %v1759, %v1807
        %v1809 = vpop.f32.mrb[0].mxu0
        %1810 = vdwg.mxu0
        %v1811 = vmax.f32 %v1695, 0.0
        %v1812 = vmax.f32 %v1697, 0.0
        %v1813 = vmax.f32 %v1797, 0.0
        %v1814 = vmax.f32 %v1699, 0.0
        %v1815 = vmax.f32 %v1701, 0.0
        %v1816 = vmax.f32 %v1800, 0.0
        %v1817 = vmax.f32 %v1705, 0.0
        %v1818 = vmax.f32 %v1707, 0.0
        %v1819 = vmax.f32 %v1805, 0.0
        %v1820 = vmax.f32 %v1709, 0.0
        %v1821 = vmax.f32 %v1711, 0.0
        %v1822 = vmax.f32 %v1808, 0.0
        %v1823 = vld [vmem:[#allocation11] sm:$0xff]
        %v1824 = vld [vmem:[#allocation11 + $0x8] sm:$0xf]
        %v1825 = vld [vmem:[#allocation11 + $0xc] sm:$0xff]
        %v1826 = vld [vmem:[#allocation11 + $0x14] sm:$0xf]
        %v1827 = vld [vmem:[#allocation11 + $0x18] sm:$0xff]
        %v1828 = vld [vmem:[#allocation11 + $0x20] sm:$0xf]
        %v1829 = vld [vmem:[#allocation11 + $0x24] sm:$0xff]
        %v1830 = vld [vmem:[#allocation11 + $0x2c] sm:$0xf]
        %v1831 = vld [vmem:[#allocation11 + $0x30] sm:$0xff]
        %v1832 = vld [vmem:[#allocation11 + $0x38] sm:$0xf]
        %v1833 = vld [vmem:[#allocation11 + $0x3c] sm:$0xff]
        %v1834 = vld [vmem:[#allocation11 + $0x44] sm:$0xf]
        %v1835 = vld [vmem:[#allocation11 + $0x48] sm:$0xff]
        %v1836 = vld [vmem:[#allocation11 + $0x50] sm:$0xf]
        %v1837 = vld [vmem:[#allocation11 + $0x54] sm:$0xff]
        %v1838 = vld [vmem:[#allocation11 + $0x5c] sm:$0xf]
        %v1839 = vld [vmem:[#allocation11 + $0x60] sm:$0xff]
        %v1840 = vld [vmem:[#allocation11 + $0x68] sm:$0xf]
        %v1841 = vld [vmem:[#allocation11 + $0x6c] sm:$0xff]
        %v1842 = vld [vmem:[#allocation11 + $0x74] sm:$0xf]
        %v1843 = vld [vmem:[#allocation11 + $0x78] sm:$0xff]
        %v1844 = vld [vmem:[#allocation11 + $0x80] sm:$0xf]
        %v1845 = vld [vmem:[#allocation11 + $0x84] sm:$0xff]
        %v1846 = vld [vmem:[#allocation11 + $0x8c] sm:$0xf]
        %v1847 = vld [vmem:[#allocation11 + $0x90] sm:$0xff]
        %v1848 = vld [vmem:[#allocation11 + $0x98] sm:$0xf]
        %v1849 = vld [vmem:[#allocation11 + $0x9c] sm:$0xff]
        %v1850 = vld [vmem:[#allocation11 + $0xa4] sm:$0xf]
        %v1851 = vld [vmem:[#allocation11 + $0xa8] sm:$0xff]
        %v1852 = vld [vmem:[#allocation11 + $0xb0] sm:$0xf]
        %v1853 = vld [vmem:[#allocation11 + $0xb4] sm:$0xff]
        %v1854 = vld [vmem:[#allocation11 + $0xbc] sm:$0xf]
        %v1855 = vld [vmem:[#allocation11 + $0xc0] sm:$0xff]
        %v1856 = vld [vmem:[#allocation11 + $0xc8] sm:$0xf]
        %v1857 = vld [vmem:[#allocation11 + $0xcc] sm:$0xff]
        %v1858 = vld [vmem:[#allocation11 + $0xd4] sm:$0xf]
        %v1859 = vld [vmem:[#allocation11 + $0xd8] sm:$0xff]
        %v1860 = vld [vmem:[#allocation11 + $0xe0] sm:$0xf]
        %v1861 = vld [vmem:[#allocation11 + $0xe4] sm:$0xff]
        %v1862 = vld [vmem:[#allocation11 + $0xec] sm:$0xf]
        %v1863 = vld [vmem:[#allocation11 + $0xf0] sm:$0xff]
        %v1864 = vld [vmem:[#allocation11 + $0xf8] sm:$0xf]
        %v1865 = vld [vmem:[#allocation11 + $0xfc] sm:$0xff]
        %v1866 = vld [vmem:[#allocation11 + $0x104] sm:$0xf]
        %v1867 = vld [vmem:[#allocation11 + $0x108] sm:$0xff]
        %v1868 = vld [vmem:[#allocation11 + $0x110] sm:$0xf]
        %v1869 = vld [vmem:[#allocation11 + $0x114] sm:$0xff]
        %v1870 = vld [vmem:[#allocation11 + $0x11c] sm:$0xf]
        %v1871 = vld [vmem:[#allocation11 + $0x120] sm:$0xff]
        %v1872 = vld [vmem:[#allocation11 + $0x128] sm:$0xf]
        %v1873 = vld [vmem:[#allocation11 + $0x12c] sm:$0xff]
        %v1874 = vld [vmem:[#allocation11 + $0x134] sm:$0xf]
        %v1875 = vld [vmem:[#allocation11 + $0x138] sm:$0xff]
        %v1876 = vld [vmem:[#allocation11 + $0x140] sm:$0xf]
        %v1877 = vld [vmem:[#allocation11 + $0x144] sm:$0xff]
        %v1878 = vld [vmem:[#allocation11 + $0x14c] sm:$0xf]
        %v1879 = vld [vmem:[#allocation11 + $0x150] sm:$0xff]
        %v1880 = vld [vmem:[#allocation11 + $0x158] sm:$0xf]
        %v1881 = vld [vmem:[#allocation11 + $0x15c] sm:$0xff]
        %v1882 = vld [vmem:[#allocation11 + $0x164] sm:$0xf]
        %v1883 = vld [vmem:[#allocation11 + $0x168] sm:$0xff]
        %v1884 = vld [vmem:[#allocation11 + $0x170] sm:$0xf]
        %v1885 = vld [vmem:[#allocation11 + $0x174] sm:$0xff]
        %v1886 = vld [vmem:[#allocation11 + $0x17c] sm:$0xf]
        %v1887 = vld [vmem:[#allocation11 + $0x180] sm:$0xff]
        %v1888 = vld [vmem:[#allocation11 + $0x188] sm:$0xf]
        %v1889 = vld [vmem:[#allocation11 + $0x18c] sm:$0xff]
        %v1890 = vld [vmem:[#allocation11 + $0x194] sm:$0xf]
        %v1891 = vld [vmem:[#allocation11 + $0x198] sm:$0xff]
        %v1892 = vld [vmem:[#allocation11 + $0x1a0] sm:$0xf]
        %v1893 = vld [vmem:[#allocation11 + $0x1a4] sm:$0xff]
        %v1894 = vld [vmem:[#allocation11 + $0x1ac] sm:$0xf]
        %v1895 = vld [vmem:[#allocation11 + $0x1b0] sm:$0xff]
        %v1896 = vld [vmem:[#allocation11 + $0x1b8] sm:$0xf]
        %v1897 = vld [vmem:[#allocation11 + $0x1bc] sm:$0xff]
        %v1898 = vld [vmem:[#allocation11 + $0x1c4] sm:$0xf]
        %v1899 = vld [vmem:[#allocation11 + $0x1c8] sm:$0xff]
        %v1900 = vld [vmem:[#allocation11 + $0x1d0] sm:$0xf]
        %v1901 = vld [vmem:[#allocation11 + $0x1d4] sm:$0xff]
        %v1902 = vld [vmem:[#allocation11 + $0x1dc] sm:$0xf]
        %v1903 = vld [vmem:[#allocation11 + $0x1e0] sm:$0xff]
        %v1904 = vld [vmem:[#allocation11 + $0x1e8] sm:$0xf]
        %v1905 = vld [vmem:[#allocation11 + $0x1ec] sm:$0xff]
        %v1906 = vld [vmem:[#allocation11 + $0x1f4] sm:$0xf]
        %v1907 = vld [vmem:[#allocation11 + $0x1f8] sm:$0xff]
        %v1908 = vld [vmem:[#allocation11 + $0x200] sm:$0xf]
        %v1909 = vld [vmem:[#allocation11 + $0x204] sm:$0xff]
        %v1910 = vld [vmem:[#allocation11 + $0x20c] sm:$0xf]
        %v1911 = vld [vmem:[#allocation11 + $0x210] sm:$0xff]
        %v1912 = vld [vmem:[#allocation11 + $0x218] sm:$0xf]
        %v1913 = vld [vmem:[#allocation11 + $0x21c] sm:$0xff]
        %v1914 = vld [vmem:[#allocation11 + $0x224] sm:$0xf]
        %v1915 = vld [vmem:[#allocation11 + $0x228] sm:$0xff]
        %v1916 = vld [vmem:[#allocation11 + $0x230] sm:$0xf]
        %v1917 = vld [vmem:[#allocation11 + $0x234] sm:$0xff]
        %v1918 = vld [vmem:[#allocation11 + $0x23c] sm:$0xf]
        %v1919 = vld [vmem:[#allocation11 + $0x240] sm:$0xff]
        %v1920 = vld [vmem:[#allocation11 + $0x248] sm:$0xf]
        %v1921 = vld [vmem:[#allocation11 + $0x24c] sm:$0xff]
        %v1922 = vld [vmem:[#allocation11 + $0x254] sm:$0xf]
        %v1923 = vld [vmem:[#allocation11 + $0x258] sm:$0xff]
        %v1924 = vld [vmem:[#allocation11 + $0x260] sm:$0xf]
        %v1925 = vld [vmem:[#allocation11 + $0x264] sm:$0xff]
        %v1926 = vld [vmem:[#allocation11 + $0x26c] sm:$0xf]
        %v1927 = vld [vmem:[#allocation11 + $0x270] sm:$0xff]
        %v1928 = vld [vmem:[#allocation11 + $0x278] sm:$0xf]
        %v1929 = vld [vmem:[#allocation11 + $0x27c] sm:$0xff]
        %v1930 = vld [vmem:[#allocation11 + $0x284] sm:$0xf]
        %v1931 = vld [vmem:[#allocation11 + $0x288] sm:$0xff]
        %v1932 = vld [vmem:[#allocation11 + $0x290] sm:$0xf]
        %v1933 = vld [vmem:[#allocation11 + $0x294] sm:$0xff]
        %v1934 = vld [vmem:[#allocation11 + $0x29c] sm:$0xf]
        %v1935 = vld [vmem:[#allocation11 + $0x2a0] sm:$0xff]
        %v1936 = vld [vmem:[#allocation11 + $0x2a8] sm:$0xf]
        %v1937 = vld [vmem:[#allocation11 + $0x2ac] sm:$0xff]
        %v1938 = vld [vmem:[#allocation11 + $0x2b4] sm:$0xf]
        %v1939 = vld [vmem:[#allocation11 + $0x2b8] sm:$0xff]
        %v1940 = vld [vmem:[#allocation11 + $0x2c0] sm:$0xf]
        %v1941 = vld [vmem:[#allocation11 + $0x2c4] sm:$0xff]
        %v1942 = vld [vmem:[#allocation11 + $0x2cc] sm:$0xf]
        %v1943 = vld [vmem:[#allocation11 + $0x2d0] sm:$0xff]
        %v1944 = vld [vmem:[#allocation11 + $0x2d8] sm:$0xf]
        %v1945 = vld [vmem:[#allocation11 + $0x2dc] sm:$0xff]
        %v1946 = vld [vmem:[#allocation11 + $0x2e4] sm:$0xf]
        %v1947 = vld [vmem:[#allocation11 + $0x2e8] sm:$0xff]
        %v1948 = vld [vmem:[#allocation11 + $0x2f0] sm:$0xf]
        %v1949 = vld [vmem:[#allocation11 + $0x2f4] sm:$0xff]
        %v1950 = vld [vmem:[#allocation11 + $0x2fc] sm:$0xf]
        %v1951 = vld [vmem:[#allocation13] sm:$0x7]
        %v1953 = vlaneseq
        %v1954 = vshrl.u32 %v1953, 7
        %v1955 = vsub.s32 0, %v1954
        %v1956 = vrot.slane %v1951, %v1955
        %v1957 = vlaneseq
        %v1958 = vshrl.u32 %v1957, 7
        %v1959 = vsub.s32 1, %v1958
        %v1960 = vrot.slane %v1951, %v1959
        %v1961 = vlaneseq
        %v1962 = vshrl.u32 %v1961, 7
        %v1963 = vsub.s32 2, %v1962
        %v1964 = vrot.slane %v1951, %v1963
        %v2096 = vunpack.c.l.b16 %v1823
        %v2097 = vunpack.c.h.b16 %v1823
        %v2098 = vunpack.c.l.b16 %v1824
        %v2099 = vunpack.c.l.b16 %v1825
        %v2100 = vunpack.c.h.b16 %v1825
        %v2101 = vunpack.c.l.b16 %v1826
        %v2102 = vunpack.c.l.b16 %v1827
        %v2103 = vunpack.c.h.b16 %v1827
        %v2104 = vunpack.c.l.b16 %v1828
        %v2105 = vunpack.c.l.b16 %v1829
        %v2106 = vunpack.c.h.b16 %v1829
        %v2107 = vunpack.c.l.b16 %v1830
        %v2108 = vunpack.c.l.b16 %v1831
        %v2109 = vunpack.c.h.b16 %v1831
        %v2110 = vunpack.c.l.b16 %v1832
        %v2111 = vunpack.c.l.b16 %v1833
        %v2112 = vunpack.c.h.b16 %v1833
        %v2113 = vunpack.c.l.b16 %v1834
        %v2114 = vunpack.c.l.b16 %v1835
        %v2115 = vunpack.c.h.b16 %v1835
        %v2116 = vunpack.c.l.b16 %v1836
        %v2117 = vunpack.c.l.b16 %v1837
        %v2118 = vunpack.c.h.b16 %v1837
        %v2119 = vunpack.c.l.b16 %v1838
        %v2120 = vunpack.c.l.b16 %v1839
        %v2121 = vunpack.c.h.b16 %v1839
        %v2122 = vunpack.c.l.b16 %v1840
        %v2123 = vunpack.c.l.b16 %v1841
        %v2124 = vunpack.c.h.b16 %v1841
        %v2125 = vunpack.c.l.b16 %v1842
        %v2126 = vunpack.c.l.b16 %v1843
        %v2127 = vunpack.c.h.b16 %v1843
        %v2128 = vunpack.c.l.b16 %v1844
        %v2129 = vunpack.c.l.b16 %v1845
        %v2130 = vunpack.c.h.b16 %v1845
        %v2131 = vunpack.c.l.b16 %v1846
        %v2132 = vunpack.c.l.b16 %v1847
        %v2133 = vunpack.c.h.b16 %v1847
        %v2134 = vunpack.c.l.b16 %v1848
        %v2135 = vunpack.c.l.b16 %v1849
        %v2136 = vunpack.c.h.b16 %v1849
        %v2137 = vunpack.c.l.b16 %v1850
        %v2138 = vunpack.c.l.b16 %v1851
        %v2139 = vunpack.c.h.b16 %v1851
        %v2140 = vunpack.c.l.b16 %v1852
        %v2141 = vunpack.c.l.b16 %v1853
        %v2142 = vunpack.c.h.b16 %v1853
        %v2143 = vunpack.c.l.b16 %v1854
        %v2144 = vunpack.c.l.b16 %v1855
        %v2145 = vunpack.c.h.b16 %v1855
        %v2146 = vunpack.c.l.b16 %v1856
        %v2147 = vunpack.c.l.b16 %v1857
        %v2148 = vunpack.c.h.b16 %v1857
        %v2149 = vunpack.c.l.b16 %v1858
        %v2150 = vunpack.c.l.b16 %v1859
        %v2151 = vunpack.c.h.b16 %v1859
        %v2152 = vunpack.c.l.b16 %v1860
        %v2153 = vunpack.c.l.b16 %v1861
        %v2154 = vunpack.c.h.b16 %v1861
        %v2155 = vunpack.c.l.b16 %v1862
        %v2156 = vunpack.c.l.b16 %v1863
        %v2157 = vunpack.c.h.b16 %v1863
        %v2158 = vunpack.c.l.b16 %v1864
        %v2159 = vunpack.c.l.b16 %v1865
        %v2160 = vunpack.c.h.b16 %v1865
        %v2161 = vunpack.c.l.b16 %v1866
        %v2162 = vunpack.c.l.b16 %v1867
        %v2163 = vunpack.c.h.b16 %v1867
        %v2164 = vunpack.c.l.b16 %v1868
        %v2165 = vunpack.c.l.b16 %v1869
        %v2166 = vunpack.c.h.b16 %v1869
        %v2167 = vunpack.c.l.b16 %v1870
        %v2168 = vunpack.c.l.b16 %v1871
        %v2169 = vunpack.c.h.b16 %v1871
        %v2170 = vunpack.c.l.b16 %v1872
        %v2171 = vunpack.c.l.b16 %v1873
        %v2172 = vunpack.c.h.b16 %v1873
        %v2173 = vunpack.c.l.b16 %v1874
        %v2174 = vunpack.c.l.b16 %v1875
        %v2175 = vunpack.c.h.b16 %v1875
        %v2176 = vunpack.c.l.b16 %v1876
        %v2177 = vunpack.c.l.b16 %v1877
        %v2178 = vunpack.c.h.b16 %v1877
        %v2179 = vunpack.c.l.b16 %v1878
        %v2180 = vunpack.c.l.b16 %v1879
        %v2181 = vunpack.c.h.b16 %v1879
        %v2182 = vunpack.c.l.b16 %v1880
        %v2183 = vunpack.c.l.b16 %v1881
        %v2184 = vunpack.c.h.b16 %v1881
        %v2185 = vunpack.c.l.b16 %v1882
        %v2186 = vunpack.c.l.b16 %v1883
        %v2187 = vunpack.c.h.b16 %v1883
        %v2188 = vunpack.c.l.b16 %v1884
        %v2189 = vunpack.c.l.b16 %v1885
        %v2190 = vunpack.c.h.b16 %v1885
        %v2191 = vunpack.c.l.b16 %v1886
        %v2192 = vunpack.c.l.b16 %v1887
        %v2193 = vunpack.c.h.b16 %v1887
        %v2194 = vunpack.c.l.b16 %v1888
        %v2195 = vunpack.c.l.b16 %v1889
        %v2196 = vunpack.c.h.b16 %v1889
        %v2197 = vunpack.c.l.b16 %v1890
        %v2198 = vunpack.c.l.b16 %v1891
        %v2199 = vunpack.c.h.b16 %v1891
        %v2200 = vunpack.c.l.b16 %v1892
        %v2201 = vunpack.c.l.b16 %v1893
        %v2202 = vunpack.c.h.b16 %v1893
        %v2203 = vunpack.c.l.b16 %v1894
        %v2204 = vunpack.c.l.b16 %v1895
        %v2205 = vunpack.c.h.b16 %v1895
        %v2206 = vunpack.c.l.b16 %v1896
        %v2207 = vunpack.c.l.b16 %v1897
        %v2208 = vunpack.c.h.b16 %v1897
        %v2209 = vunpack.c.l.b16 %v1898
        %v2210 = vunpack.c.l.b16 %v1899
        %v2211 = vunpack.c.h.b16 %v1899
        %v2212 = vunpack.c.l.b16 %v1900
        %v2213 = vunpack.c.l.b16 %v1901
        %v2214 = vunpack.c.h.b16 %v1901
        %v2215 = vunpack.c.l.b16 %v1902
        %v2216 = vunpack.c.l.b16 %v1903
        %v2217 = vunpack.c.h.b16 %v1903
        %v2218 = vunpack.c.l.b16 %v1904
        %v2219 = vunpack.c.l.b16 %v1905
        %v2220 = vunpack.c.h.b16 %v1905
        %v2221 = vunpack.c.l.b16 %v1906
        %v2222 = vunpack.c.l.b16 %v1907
        %v2223 = vunpack.c.h.b16 %v1907
        %v2224 = vunpack.c.l.b16 %v1908
        %v2225 = vunpack.c.l.b16 %v1909
        %v2226 = vunpack.c.h.b16 %v1909
        %v2227 = vunpack.c.l.b16 %v1910
        %v2228 = vunpack.c.l.b16 %v1911
        %v2229 = vunpack.c.h.b16 %v1911
        %v2230 = vunpack.c.l.b16 %v1912
        %v2231 = vunpack.c.l.b16 %v1913
        %v2232 = vunpack.c.h.b16 %v1913
        %v2233 = vunpack.c.l.b16 %v1914
        %v2234 = vunpack.c.l.b16 %v1915
        %v2235 = vunpack.c.h.b16 %v1915
        %v2236 = vunpack.c.l.b16 %v1916
        %v2237 = vunpack.c.l.b16 %v1917
        %v2238 = vunpack.c.h.b16 %v1917
        %v2239 = vunpack.c.l.b16 %v1918
        %v2240 = vunpack.c.l.b16 %v1919
        %v2241 = vunpack.c.h.b16 %v1919
        %v2242 = vunpack.c.l.b16 %v1920
        %v2243 = vunpack.c.l.b16 %v1921
        %v2244 = vunpack.c.h.b16 %v1921
        %v2245 = vunpack.c.l.b16 %v1922
        %v2246 = vunpack.c.l.b16 %v1923
        %v2247 = vunpack.c.h.b16 %v1923
        %v2248 = vunpack.c.l.b16 %v1924
        %v2249 = vunpack.c.l.b16 %v1925
        %v2250 = vunpack.c.h.b16 %v1925
        %v2251 = vunpack.c.l.b16 %v1926
        %v2252 = vunpack.c.l.b16 %v1927
        %v2253 = vunpack.c.h.b16 %v1927
        %v2254 = vunpack.c.l.b16 %v1928
        %v2255 = vunpack.c.l.b16 %v1929
        %v2256 = vunpack.c.h.b16 %v1929
        %v2257 = vunpack.c.l.b16 %v1930
        %v2258 = vunpack.c.l.b16 %v1931
        %v2259 = vunpack.c.h.b16 %v1931
        %v2260 = vunpack.c.l.b16 %v1932
        %v2261 = vunpack.c.l.b16 %v1933
        %v2262 = vunpack.c.h.b16 %v1933
        %v2263 = vunpack.c.l.b16 %v1934
        %v2264 = vunpack.c.l.b16 %v1935
        %v2265 = vunpack.c.h.b16 %v1935
        %v2266 = vunpack.c.l.b16 %v1936
        %v2267 = vunpack.c.l.b16 %v1937
        %v2268 = vunpack.c.h.b16 %v1937
        %v2269 = vunpack.c.l.b16 %v1938
        %v2270 = vunpack.c.l.b16 %v1939
        %v2271 = vunpack.c.h.b16 %v1939
        %v2272 = vunpack.c.l.b16 %v1940
        %v2273 = vunpack.c.l.b16 %v1941
        %v2274 = vunpack.c.h.b16 %v1941
        %v2275 = vunpack.c.l.b16 %v1942
        %v2276 = vunpack.c.l.b16 %v1943
        %v2277 = vunpack.c.h.b16 %v1943
        %v2278 = vunpack.c.l.b16 %v1944
        %v2279 = vunpack.c.l.b16 %v1945
        %v2280 = vunpack.c.h.b16 %v1945
        %v2281 = vunpack.c.l.b16 %v1946
        %v2282 = vunpack.c.l.b16 %v1947
        %v2283 = vunpack.c.h.b16 %v1947
        %v2284 = vunpack.c.l.b16 %v1948
        %v2285 = vunpack.c.l.b16 %v1949
        %v2286 = vunpack.c.h.b16 %v1949
        %v2287 = vunpack.c.l.b16 %v1950
        %v2288 = vpack.c.b16 %v2099, %v2096
        %v2289 = vpack.c.b16 %v2100, %v2097
        %v2290 = vpack.c.b16 %v2101, %v2098
        %v2291 = vpack.c.b16 %v2105, %v2102
        %v2292 = vpack.c.b16 %v2106, %v2103
        %v2293 = vpack.c.b16 %v2107, %v2104
        %v2294 = vpack.c.b16 %v2111, %v2108
        %v2295 = vpack.c.b16 %v2112, %v2109
        %v2296 = vpack.c.b16 %v2113, %v2110
        %v2297 = vpack.c.b16 %v2117, %v2114
        %v2298 = vpack.c.b16 %v2118, %v2115
        %v2299 = vpack.c.b16 %v2119, %v2116
        %v2300 = vpack.c.b16 %v2123, %v2120
        %v2301 = vpack.c.b16 %v2124, %v2121
        %v2302 = vpack.c.b16 %v2125, %v2122
        %v2303 = vpack.c.b16 %v2129, %v2126
        %v2304 = vpack.c.b16 %v2130, %v2127
        %v2305 = vpack.c.b16 %v2131, %v2128
        %v2306 = vpack.c.b16 %v2135, %v2132
        %v2307 = vpack.c.b16 %v2136, %v2133
        %v2308 = vpack.c.b16 %v2137, %v2134
        %v2309 = vpack.c.b16 %v2141, %v2138
        %v2310 = vpack.c.b16 %v2142, %v2139
        %v2311 = vpack.c.b16 %v2143, %v2140
        %v2312 = vpack.c.b16 %v2147, %v2144
        %v2313 = vpack.c.b16 %v2148, %v2145
        %v2314 = vpack.c.b16 %v2149, %v2146
        %v2315 = vpack.c.b16 %v2153, %v2150
        %v2316 = vpack.c.b16 %v2154, %v2151
        %v2317 = vpack.c.b16 %v2155, %v2152
        %v2318 = vpack.c.b16 %v2159, %v2156
        %v2319 = vpack.c.b16 %v2160, %v2157
        %v2320 = vpack.c.b16 %v2161, %v2158
        %v2321 = vpack.c.b16 %v2165, %v2162
        %v2322 = vpack.c.b16 %v2166, %v2163
        %v2323 = vpack.c.b16 %v2167, %v2164
        %v2324 = vpack.c.b16 %v2171, %v2168
        %v2325 = vpack.c.b16 %v2172, %v2169
        %v2326 = vpack.c.b16 %v2173, %v2170
        %v2327 = vpack.c.b16 %v2177, %v2174
        %v2328 = vpack.c.b16 %v2178, %v2175
        %v2329 = vpack.c.b16 %v2179, %v2176
        %v2330 = vpack.c.b16 %v2183, %v2180
        %v2331 = vpack.c.b16 %v2184, %v2181
        %v2332 = vpack.c.b16 %v2185, %v2182
        %v2333 = vpack.c.b16 %v2189, %v2186
        %v2334 = vpack.c.b16 %v2190, %v2187
        %v2335 = vpack.c.b16 %v2191, %v2188
        %v2336 = vpack.c.b16 %v2195, %v2192
        %v2337 = vpack.c.b16 %v2196, %v2193
        %v2338 = vpack.c.b16 %v2197, %v2194
        %v2339 = vpack.c.b16 %v2201, %v2198
        %v2340 = vpack.c.b16 %v2202, %v2199
        %v2341 = vpack.c.b16 %v2203, %v2200
        %v2342 = vpack.c.b16 %v2207, %v2204
        %v2343 = vpack.c.b16 %v2208, %v2205
        %v2344 = vpack.c.b16 %v2209, %v2206
        %v2345 = vpack.c.b16 %v2213, %v2210
        %v2346 = vpack.c.b16 %v2214, %v2211
        %v2347 = vpack.c.b16 %v2215, %v2212
        %v2348 = vpack.c.b16 %v2219, %v2216
        %v2349 = vpack.c.b16 %v2220, %v2217
        %v2350 = vpack.c.b16 %v2221, %v2218
        %v2351 = vpack.c.b16 %v2225, %v2222
        %v2352 = vpack.c.b16 %v2226, %v2223
        %v2353 = vpack.c.b16 %v2227, %v2224
        %v2354 = vpack.c.b16 %v2231, %v2228
        %v2355 = vpack.c.b16 %v2232, %v2229
        %v2356 = vpack.c.b16 %v2233, %v2230
        %v2357 = vpack.c.b16 %v2237, %v2234
        %v2358 = vpack.c.b16 %v2238, %v2235
        %v2359 = vpack.c.b16 %v2239, %v2236
        %v2360 = vpack.c.b16 %v2243, %v2240
        %v2361 = vpack.c.b16 %v2244, %v2241
        %v2362 = vpack.c.b16 %v2245, %v2242
        %v2363 = vpack.c.b16 %v2249, %v2246
        %v2364 = vpack.c.b16 %v2250, %v2247
        %v2365 = vpack.c.b16 %v2251, %v2248
        %v2366 = vpack.c.b16 %v2255, %v2252
        %v2367 = vpack.c.b16 %v2256, %v2253
        %v2368 = vpack.c.b16 %v2257, %v2254
        %v2369 = vpack.c.b16 %v2261, %v2258
        %v2370 = vpack.c.b16 %v2262, %v2259
        %v2371 = vpack.c.b16 %v2263, %v2260
        %v2372 = vpack.c.b16 %v2267, %v2264
        %v2373 = vpack.c.b16 %v2268, %v2265
        %v2374 = vpack.c.b16 %v2269, %v2266
        %v2375 = vpack.c.b16 %v2273, %v2270
        %v2376 = vpack.c.b16 %v2274, %v2271
        %v2377 = vpack.c.b16 %v2275, %v2272
        %v2378 = vpack.c.b16 %v2279, %v2276
        %v2379 = vpack.c.b16 %v2280, %v2277
        %v2380 = vpack.c.b16 %v2281, %v2278
        %v2381 = vpack.c.b16 %v2285, %v2282
        %v2382 = vpack.c.b16 %v2286, %v2283
        %v2383 = vpack.c.b16 %v2287, %v2284
        %2480 = vmatprep.subr.bf16.mxu0 %v2289
        %2481 = vmatpush1.bf16.msra.mxu0 %v2288
        %2482 = vmatprep.subr.bf16.mxu0 %v2292
        %2483 = vmatpush1.bf16.msra.mxu0 %v2291
        %2484 = vmatprep.subr.bf16.mxu0 %v2295
        %2485 = vmatpush1.bf16.msra.mxu0 %v2294
        %2486 = vmatprep.subr.bf16.mxu0 %v2298
        %2487 = vmatpush1.bf16.msra.mxu0 %v2297
        %2488 = vmatprep.subr.bf16.mxu0 %v2301
        %2489 = vmatpush1.bf16.msra.mxu0 %v2300
        %2490 = vmatprep.subr.bf16.mxu0 %v2304
        %2491 = vmatpush1.bf16.msra.mxu0 %v2303
        %2492 = vmatprep.subr.bf16.mxu0 %v2307
        %2493 = vmatpush1.bf16.msra.mxu0 %v2306
        %2494 = vmatprep.subr.bf16.mxu0 %v2310
        %2495 = vmatpush1.bf16.msra.mxu0 %v2309
        %2496 = vmatprep.subr.bf16.mxu0 %v2313
        %2497 = vmatpush1.bf16.msra.mxu0 %v2312
        %2498 = vmatprep.subr.bf16.mxu0 %v2316
        %2499 = vmatpush1.bf16.msra.mxu0 %v2315
        %2500 = vmatprep.subr.bf16.mxu0 %v2319
        %2501 = vmatpush1.bf16.msra.mxu0 %v2318
        %2502 = vmatprep.subr.bf16.mxu0 %v2322
        %2503 = vmatpush1.bf16.msra.mxu0 %v2321
        %2504 = vmatprep.subr.bf16.mxu0 %v2325
        %2505 = vmatpush1.bf16.msra.mxu0 %v2324
        %2506 = vmatprep.subr.bf16.mxu0 %v2328
        %2507 = vmatpush1.bf16.msra.mxu0 %v2327
        %2508 = vmatprep.subr.bf16.mxu0 %v2331
        %2509 = vmatpush1.bf16.msra.mxu0 %v2330
        %2510 = vmatprep.subr.bf16.mxu0 %v2334
        %2511 = vmatpush1.bf16.msra.mxu0 %v2333
        %2512 = vmatprep.mubr.bf16.mxu0 %v943
        %2513 = vmatmul.mubr.bf16.gmra.mrb[0].mxu0 %v942
        %v2514 = vpop.f32.mrb[0].mxu0
        %v2515 = vadd.f32 %v1956, %v2514
        %v2516 = vpop.f32.mrb[0].mxu0
        %v2517 = vadd.f32 %v1960, %v2516
        %v2518 = vpop.f32.mrb[0].mxu0
        %v2519 = vadd.f32 %v1956, %v2518
        %v2520 = vpop.f32.mrb[0].mxu0
        %v2521 = vadd.f32 %v1960, %v2520
        %2522 = vmatprep.mubr.bf16.mxu0 %v947
        %2523 = vmatmul.mubr.bf16.gmra.mrb[0].mxu0 %v946
        %v2524 = vpop.f32.mrb[0].mxu0
        %v2525 = vadd.f32 %v1956, %v2524
        %v2526 = vpop.f32.mrb[0].mxu0
        %v2527 = vadd.f32 %v1960, %v2526
        %v2528 = vpop.f32.mrb[0].mxu0
        %v2529 = vadd.f32 %v1956, %v2528
        %v2530 = vpop.f32.mrb[0].mxu0
        %v2531 = vadd.f32 %v1960, %v2530
        %2532 = vdwg.mxu0
        %2533 = vmatprep.subr.bf16.mxu0 %v2337
        %2534 = vmatpush1.bf16.msra.mxu0 %v2336
        %2535 = vmatprep.subr.bf16.mxu0 %v2340
        %2536 = vmatpush1.bf16.msra.mxu0 %v2339
        %2537 = vmatprep.subr.bf16.mxu0 %v2343
        %2538 = vmatpush1.bf16.msra.mxu0 %v2342
        %2539 = vmatprep.subr.bf16.mxu0 %v2346
        %2540 = vmatpush1.bf16.msra.mxu0 %v2345
        %2541 = vmatprep.subr.bf16.mxu0 %v2349
        %2542 = vmatpush1.bf16.msra.mxu0 %v2348
        %2543 = vmatprep.subr.bf16.mxu0 %v2352
        %2544 = vmatpush1.bf16.msra.mxu0 %v2351
        %2545 = vmatprep.subr.bf16.mxu0 %v2355
        %2546 = vmatpush1.bf16.msra.mxu0 %v2354
        %2547 = vmatprep.subr.bf16.mxu0 %v2358
        %2548 = vmatpush1.bf16.msra.mxu0 %v2357
        %2549 = vmatprep.subr.bf16.mxu0 %v2361
        %2550 = vmatpush1.bf16.msra.mxu0 %v2360
        %2551 = vmatprep.subr.bf16.mxu0 %v2364
        %2552 = vmatpush1.bf16.msra.mxu0 %v2363
        %2553 = vmatprep.subr.bf16.mxu0 %v2367
        %2554 = vmatpush1.bf16.msra.mxu0 %v2366
        %2555 = vmatprep.subr.bf16.mxu0 %v2370
        %2556 = vmatpush1.bf16.msra.mxu0 %v2369
        %2557 = vmatprep.subr.bf16.mxu0 %v2373
        %2558 = vmatpush1.bf16.msra.mxu0 %v2372
        %2559 = vmatprep.subr.bf16.mxu0 %v2376
        %2560 = vmatpush1.bf16.msra.mxu0 %v2375
        %2561 = vmatprep.subr.bf16.mxu0 %v2379
        %2562 = vmatpush1.bf16.msra.mxu0 %v2378
        %2563 = vmatprep.subr.bf16.mxu0 %v2382
        %2564 = vmatpush1.bf16.msra.mxu0 %v2381
        %2565 = vmatprep.mubr.bf16.mxu0 %v945
        %2566 = vmatmul.mubr.bf16.gmra.mrb[0].mxu0 %v944
        %v2567 = vpop.f32.mrb[0].mxu0
        %v2568 = vadd.f32 %v2515, %v2567
        %v2569 = vpop.f32.mrb[0].mxu0
        %v2570 = vadd.f32 %v2517, %v2569
        %v2571 = vpop.f32.mrb[0].mxu0
        %v2572 = vadd.f32 %v2519, %v2571
        %v2573 = vpop.f32.mrb[0].mxu0
        %v2574 = vadd.f32 %v2521, %v2573
        %2575 = vmatprep.mubr.bf16.mxu0 %v949
        %2576 = vmatmul.mubr.bf16.gmra.mrb[0].mxu0 %v948
        %v2577 = vpop.f32.mrb[0].mxu0
        %v2578 = vadd.f32 %v2525, %v2577
        %v2579 = vpop.f32.mrb[0].mxu0
        %v2580 = vadd.f32 %v2527, %v2579
        %v2581 = vpop.f32.mrb[0].mxu0
        %v2582 = vadd.f32 %v2529, %v2581
        %v2583 = vpop.f32.mrb[0].mxu0
        %v2584 = vadd.f32 %v2531, %v2583
        %2585 = vdwg.mxu0
        %2586 = vmatprep.subr.bf16.mxu0 0
        %2587 = vmatpush1.bf16.msra.mxu0 %v2290
        %2588 = vmatprep.subr.bf16.mxu0 0
        %2589 = vmatpush1.bf16.msra.mxu0 %v2293
        %2590 = vmatprep.subr.bf16.mxu0 0
        %2591 = vmatpush1.bf16.msra.mxu0 %v2296
        %2592 = vmatprep.subr.bf16.mxu0 0
        %2593 = vmatpush1.bf16.msra.mxu0 %v2299
        %2594 = vmatprep.subr.bf16.mxu0 0
        %2595 = vmatpush1.bf16.msra.mxu0 %v2302
        %2596 = vmatprep.subr.bf16.mxu0 0
        %2597 = vmatpush1.bf16.msra.mxu0 %v2305
        %2598 = vmatprep.subr.bf16.mxu0 0
        %2599 = vmatpush1.bf16.msra.mxu0 %v2308
        %2600 = vmatprep.subr.bf16.mxu0 0
        %2601 = vmatpush1.bf16.msra.mxu0 %v2311
        %2602 = vmatprep.subr.bf16.mxu0 0
        %2603 = vmatpush1.bf16.msra.mxu0 %v2314
        %2604 = vmatprep.subr.bf16.mxu0 0
        %2605 = vmatpush1.bf16.msra.mxu0 %v2317
        %2606 = vmatprep.subr.bf16.mxu0 0
        %2607 = vmatpush1.bf16.msra.mxu0 %v2320
        %2608 = vmatprep.subr.bf16.mxu0 0
        %2609 = vmatpush1.bf16.msra.mxu0 %v2323
        %2610 = vmatprep.subr.bf16.mxu0 0
        %2611 = vmatpush1.bf16.msra.mxu0 %v2326
        %2612 = vmatprep.subr.bf16.mxu0 0
        %2613 = vmatpush1.bf16.msra.mxu0 %v2329
        %2614 = vmatprep.subr.bf16.mxu0 0
        %2615 = vmatpush1.bf16.msra.mxu0 %v2332
        %2616 = vmatprep.subr.bf16.mxu0 0
        %2617 = vmatpush1.bf16.msra.mxu0 %v2335
        %2618 = vmatprep.mubr.bf16.mxu0 %v943
        %2619 = vmatmul.mubr.bf16.gmra.mrb[0].mxu0 %v942
        %v2620 = vpop.f32.mrb[0].mxu0
        %v2621 = vadd.f32 %v1964, %v2620
        %v2622 = vpop.f32.mrb[0].mxu0
        %v2623 = vpop.f32.mrb[0].mxu0
        %v2624 = vadd.f32 %v1964, %v2623
        %v2625 = vpop.f32.mrb[0].mxu0
        %2626 = vmatprep.mubr.bf16.mxu0 %v947
        %2627 = vmatmul.mubr.bf16.gmra.mrb[0].mxu0 %v946
        %v2628 = vpop.f32.mrb[0].mxu0
        %v2629 = vadd.f32 %v1964, %v2628
        %v2630 = vpop.f32.mrb[0].mxu0
        %v2631 = vpop.f32.mrb[0].mxu0
        %v2632 = vadd.f32 %v1964, %v2631
        %v2633 = vpop.f32.mrb[0].mxu0
        %2634 = vdwg.mxu0
        %2635 = vmatprep.subr.bf16.mxu0 0
        %2636 = vmatpush1.bf16.msra.mxu0 %v2338
        %2637 = vmatprep.subr.bf16.mxu0 0
        %2638 = vmatpush1.bf16.msra.mxu0 %v2341
        %2639 = vmatprep.subr.bf16.mxu0 0
        %2640 = vmatpush1.bf16.msra.mxu0 %v2344
        %2641 = vmatprep.subr.bf16.mxu0 0
        %2642 = vmatpush1.bf16.msra.mxu0 %v2347
        %2643 = vmatprep.subr.bf16.mxu0 0
        %2644 = vmatpush1.bf16.msra.mxu0 %v2350
        %2645 = vmatprep.subr.bf16.mxu0 0
        %2646 = vmatpush1.bf16.msra.mxu0 %v2353
        %2647 = vmatprep.subr.bf16.mxu0 0
        %2648 = vmatpush1.bf16.msra.mxu0 %v2356
        %2649 = vmatprep.subr.bf16.mxu0 0
        %2650 = vmatpush1.bf16.msra.mxu0 %v2359
        %2651 = vmatprep.subr.bf16.mxu0 0
        %2652 = vmatpush1.bf16.msra.mxu0 %v2362
        %2653 = vmatprep.subr.bf16.mxu0 0
        %2654 = vmatpush1.bf16.msra.mxu0 %v2365
        %2655 = vmatprep.subr.bf16.mxu0 0
        %2656 = vmatpush1.bf16.msra.mxu0 %v2368
        %2657 = vmatprep.subr.bf16.mxu0 0
        %2658 = vmatpush1.bf16.msra.mxu0 %v2371
        %2659 = vmatprep.subr.bf16.mxu0 0
        %2660 = vmatpush1.bf16.msra.mxu0 %v2374
        %2661 = vmatprep.subr.bf16.mxu0 0
        %2662 = vmatpush1.bf16.msra.mxu0 %v2377
        %2663 = vmatprep.subr.bf16.mxu0 0
        %2664 = vmatpush1.bf16.msra.mxu0 %v2380
        %2665 = vmatprep.subr.bf16.mxu0 0
        %2666 = vmatpush1.bf16.msra.mxu0 %v2383
        %2667 = vmatprep.mubr.bf16.mxu0 %v945
        %2668 = vmatmul.mubr.bf16.gmra.mrb[0].mxu0 %v944
        %v2669 = vpop.f32.mrb[0].mxu0
        %v2670 = vadd.f32 %v2621, %v2669
        %v2671 = vpop.f32.mrb[0].mxu0
        %v2672 = vpop.f32.mrb[0].mxu0
        %v2673 = vadd.f32 %v2624, %v2672
        %v2674 = vpop.f32.mrb[0].mxu0
        %2675 = vmatprep.mubr.bf16.mxu0 %v949
        %2676 = vmatmul.mubr.bf16.gmra.mrb[0].mxu0 %v948
        %v2677 = vpop.f32.mrb[0].mxu0
        %v2678 = vadd.f32 %v2629, %v2677
        %v2679 = vpop.f32.mrb[0].mxu0
        %v2680 = vpop.f32.mrb[0].mxu0
        %v2681 = vadd.f32 %v2632, %v2680
        %v2682 = vpop.f32.mrb[0].mxu0
        %2683 = vdwg.mxu0
        %v2684 = vmax.f32 %v2568, 0.0
        %v2685 = vmax.f32 %v2570, 0.0
        %v2686 = vmax.f32 %v2670, 0.0
        %v2687 = vmax.f32 %v2572, 0.0
        %v2688 = vmax.f32 %v2574, 0.0
        %v2689 = vmax.f32 %v2673, 0.0
        %v2690 = vmax.f32 %v2578, 0.0
        %v2691 = vmax.f32 %v2580, 0.0
        %v2692 = vmax.f32 %v2678, 0.0
        %v2693 = vmax.f32 %v2582, 0.0
        %v2694 = vmax.f32 %v2584, 0.0
        %v2695 = vmax.f32 %v2681, 0.0
        %v2696 = vld [vmem:[#allocation14] sm:$0x7]
        %v2698 = vlaneseq
        %v2699 = vshrl.u32 %v2698, 7
        %v2700 = vsub.s32 0, %v2699
        %v2701 = vrot.slane %v2696, %v2700
        %v2702 = vlaneseq
        %v2703 = vshrl.u32 %v2702, 7
        %v2704 = vsub.s32 1, %v2703
        %v2705 = vrot.slane %v2696, %v2704
        %v2706 = vlaneseq
        %v2707 = vshrl.u32 %v2706, 7
        %v2708 = vsub.s32 2, %v2707
        %v2709 = vrot.slane %v2696, %v2708
        %v2713 = vmul.f32 %v1811, %v2701
        %v2714 = vmul.f32 %v1812, %v2705
        %v2715 = vmul.f32 %v1813, %v2709
        %v2716 = vmul.f32 %v1814, %v2701
        %v2717 = vmul.f32 %v1815, %v2705
        %v2718 = vmul.f32 %v1816, %v2709
        %v2719 = vmul.f32 %v1817, %v2701
        %v2720 = vmul.f32 %v1818, %v2705
        %v2721 = vmul.f32 %v1819, %v2709
        %v2722 = vmul.f32 %v1820, %v2701
        %v2723 = vmul.f32 %v1821, %v2705
        %v2724 = vmul.f32 %v1822, %v2709
        %v2725 = vadd.f32 %v2713, %v2714
        %v2726 = vadd.f32 %v2725, %v2715
        %2727 = vadd.xlane.f32.xlu0 %v2726
        %v2728 = vpop.xlane.xlu0 %2727
        %v2729 = vadd.f32 %v2716, %v2717
        %v2730 = vadd.f32 %v2729, %v2718
        %2731 = vadd.xlane.f32.xlu0 %v2730
        %v2732 = vpop.xlane.xlu0 %2731
        %v2733 = vadd.f32 %v2719, %v2720
        %v2734 = vadd.f32 %v2733, %v2721
        %2735 = vadd.xlane.f32.xlu0 %v2734
        %v2736 = vpop.xlane.xlu0 %2735
        %v2737 = vadd.f32 %v2722, %v2723
        %v2738 = vadd.f32 %v2737, %v2724
        %2739 = vadd.xlane.f32.xlu0 %v2738
        %v2740 = vpop.xlane.xlu0 %2739
        %vm2741 = vcmask 7168
        %2742 = vst.msk [vmem:[%s454] sm:$0xff] %vm2741, %v2728
        %2743 = vst.msk [vmem:[%s454 + $0x8] sm:$0xff] %vm2741, %v2732
        %2744 = vst.msk [vmem:[%s454 + $0x10] sm:$0xff] %vm2741, %v2736
        %2745 = vst.msk [vmem:[%s454 + $0x18] sm:$0xff] %vm2741, %v2740
        %v2746 = vld [vmem:[#allocation16] sm:$0x7]
        %v2748 = vlaneseq
        %v2749 = vshrl.u32 %v2748, 7
        %v2750 = vsub.s32 0, %v2749
        %v2751 = vrot.slane %v2746, %v2750
        %v2752 = vlaneseq
        %v2753 = vshrl.u32 %v2752, 7
        %v2754 = vsub.s32 1, %v2753
        %v2755 = vrot.slane %v2746, %v2754
        %v2756 = vlaneseq
        %v2757 = vshrl.u32 %v2756, 7
        %v2758 = vsub.s32 2, %v2757
        %v2759 = vrot.slane %v2746, %v2758
        %v2763 = vmul.f32 %v2684, %v2751
        %v2764 = vmul.f32 %v2685, %v2755
        %v2765 = vmul.f32 %v2686, %v2759
        %v2766 = vmul.f32 %v2687, %v2751
        %v2767 = vmul.f32 %v2688, %v2755
        %v2768 = vmul.f32 %v2689, %v2759
        %v2769 = vmul.f32 %v2690, %v2751
        %v2770 = vmul.f32 %v2691, %v2755
        %v2771 = vmul.f32 %v2692, %v2759
        %v2772 = vmul.f32 %v2693, %v2751
        %v2773 = vmul.f32 %v2694, %v2755
        %v2774 = vmul.f32 %v2695, %v2759
        %v2775 = vadd.f32 %v2763, %v2764
        %v2776 = vadd.f32 %v2775, %v2765
        %2777 = vadd.xlane.f32.xlu0 %v2776
        %v2778 = vpop.xlane.xlu0 %2777
        %v2779 = vadd.f32 %v2766, %v2767
        %v2780 = vadd.f32 %v2779, %v2768
        %2781 = vadd.xlane.f32.xlu0 %v2780
        %v2782 = vpop.xlane.xlu0 %2781
        %v2783 = vadd.f32 %v2769, %v2770
        %v2784 = vadd.f32 %v2783, %v2771
        %2785 = vadd.xlane.f32.xlu0 %v2784
        %v2786 = vpop.xlane.xlu0 %2785
        %v2787 = vadd.f32 %v2772, %v2773
        %v2788 = vadd.f32 %v2787, %v2774
        %2789 = vadd.xlane.f32.xlu0 %v2788
        %v2790 = vpop.xlane.xlu0 %2789
        %vm2791 = vcmask 15368
        %2792 = vst.msk [vmem:[%s454] sm:$0xff] %vm2791, %v2778
        %2793 = vst.msk [vmem:[%s454 + $0x8] sm:$0xff] %vm2791, %v2782
        %2794 = vst.msk [vmem:[%s454 + $0x10] sm:$0xff] %vm2791, %v2786
        %2795 = vst.msk [vmem:[%s454 + $0x18] sm:$0xff] %vm2791, %v2790
        %s2796 = sand.u32 %s232, 1
        %s2797 = scalar_lea.sflag [#allocation4], %s2796
        %s2798 = sand.u32 %s232, 1
        %s2799 = smul.addr %s2798, 32
        %s2800 = scalar_lea.vmem [#allocation17], %s2799
        // Predicated region
        $region93: #{_lambda_.1} parent=55 // pred_check
          %p2801 = pneg %p242
        $region94: #{_lambda_.1} parent=55 // pred_check_branch
          %2803 = sbr.rel (%p2801) target = $region96
        $region95: #{_lambda_.1} parent=55 // pred_region
          %s2804 = smul.u32 4, %s30
          %s2806 = ssub.s32 512, 512
          %2807 = vsyncadd %s2797, %s2806
          %s2808 = smul.addr %s2804, 128
          %s2809 = scalar_lea.hbm %s9, %s2808
          %s2810 = sshll.u32 %s2800, 4
          %s2811 = int_to_ptr.vmem [resolvable:$true] %s2810
          %2816 = dma.vmem_to_hbm [thread:$0]  %s2811, 512, %s2809, %s2797, 128, 128, 8
        $region96: #{_lambda_.1} parent=55 // pred_fallthru
          _
      $region56: #{_lambda_.1} parent=5 // pred_fallthru
        _
      %p2817 = scmp.le.s32.totalorder 2, %s25
      // Predicated region
      $region97: #{_lambda_.1} parent=5 // pred_check
        %p2818 = pneg %p2817
      $region98: #{_lambda_.1} parent=5 // pred_check_branch
        %2820 = sbr.rel (%p2818) target = $region100
      $region99: #{_lambda_.1} parent=5 // pred_region
        %s2821 = ssub.s32 %s25, 2
        // Predicated region
        $region101: #{_lambda_.1} parent=99 // pred_check
          %p2822 = pneg %p248
        $region102: #{_lambda_.1} parent=99 // pred_check_branch
          %2824 = sbr.rel (%p2822) target = $region104
        $region103: #{_lambda_.1} parent=99 // pred_region
          %s2825 = sand.u32 %s233, 1
          %s2826 = scalar_lea.sflag [#allocation4], %s2825
          %s2827 = sand.u32 %s233, 1
          %s2828 = smul.addr %s2827, 32
          %s2829 = scalar_lea.vmem [#allocation17], %s2828
          %2830 = dma.done %s2826, 512
        $region104: #{_lambda_.1} parent=99 // pred_fallthru
          _
      $region100: #{_lambda_.1} parent=5 // pred_fallthru
        _
    $region6: #{_lambda_.1} parent=1 // loop_footer
      %s29 = sadd.s32 1, %s25
    $region7: #{_lambda_.1} parent=1 // loop_footer_branch
      %24 = sbr.rel target = $region3
    $region8: #{_lambda_.1} parent=1 // loop_exit
      _
    %2831 = vsyncpa [#allocation3], 1
    %s2832 = scalar_lea.sflag [#allocation3], 1
    %2833 = vsyncpa %s2832, 1
    %2834 = vsyncpa [#allocation6], 1
    %2835 = vsyncpa [#allocation9], 1
    %2836 = vsyncpa [#allocation12], 1
    %2837 = vsyncpa [#allocation15], 1
    %2838 = vsyncpa [#allocation4], 1
    %s2839 = scalar_lea.sflag [#allocation4], 1
    %2840 = vsyncpa %s2839, 1

</llo_original>
